<compile_context>
chip_gen: v7x
topology: tpu7x:2x2x1
jax: 0.10.0
libtpu: 0.0.40
codegen_flags: <defaults>
</compile_context>

<pallas_src>
import functools

import jax
import jax.numpy as jnp
from jax.experimental import pallas as pl
from jax.experimental.pallas import tpu as pltpu


# ----------------------------------------------------------------------------
# Fused per-level Pallas kernel
# ----------------------------------------------------------------------------
def _level_kernel(x_ref, cond_ref, anb_ref, ans_ref, winv_ref,
                  wz_ref, wc_ref, bc_ref,
                  y_ref, ld_ref,
                  *, n_additional, n_flow, c2):
    """Runs every FlowStep of one level on a (pixel_tile, C) block.

    x_ref    : (1, tp, C)            f32  activation tile
    cond_ref : (1, tp, Ccond)        f32  conditional-features tile
    anb_ref  : (n_all, 1, C)         f32  actnorm bias per step
    ans_ref  : (n_all, 1, C)         f32  actnorm scale (= exp(logs)) per step
    winv_ref : (n_all, C, C)         bf16 invertible 1x1 conv weights per step
    wz_ref   : (n_flow, c2, 2*c2)    bf16 coupling weights (z1 rows, [shift|raw])
    wc_ref   : (n_flow, Ccond, 2*c2) bf16 coupling weights (cond rows)
    bc_ref   : (n_flow, 1, 2*c2)     f32  coupling bias
    y_ref    : (1, tp, C)            f32  output tile
    ld_ref   : (1, 1, c2)            f32  per-batch coupling log-scale sum
                                          (accumulated across pixel tiles)
    """
    pt = pl.program_id(1)

    @pl.when(pt == 0)
    def _():
        ld_ref[...] = jnp.zeros_like(ld_ref)

    y = x_ref[0].astype(jnp.float32)                 # (tp, C), stays in VMEM/vregs
    cond_bf = cond_ref[0].astype(jnp.bfloat16)       # hoisted cast, reused per step

    acc_ls = jnp.zeros((1, c2), jnp.float32)
    n_all = n_additional + n_flow
    for s in range(n_all):                           # unrolled: static weight indices
        # --- ActNorm: (x + bias) * exp(logs) --------------------------------
        y = (y + anb_ref[s]) * ans_ref[s]
        # --- Invertible 1x1 conv: y @ W  (bf16 MXU, f32 accumulate) ---------
        y = jnp.dot(y.astype(jnp.bfloat16), winv_ref[s],
                    preferred_element_type=jnp.float32)
        if s >= n_additional:
            # --- Conditional affine coupling --------------------------------
            j = s - n_additional
            z1 = y[:, :c2]
            z2 = y[:, c2:]
            # fused [shift | raw] matmul; cond contribution added separately
            # (no (M, c2+Ccond) concat ever materialized)
            h = jnp.dot(z1.astype(jnp.bfloat16), wz_ref[j],
                        preferred_element_type=jnp.float32)
            h = h + jnp.dot(cond_bf, wc_ref[j],
                            preferred_element_type=jnp.float32)
            h = h + bc_ref[j]
            shift = h[:, :c2]
            raw = h[:, c2:] + 2.0
            scale = jax.nn.sigmoid(raw)
            z2 = (z2 + shift) * scale
            # log(sigmoid(raw)) == -softplus(-raw): numerically safe for the logdet
            acc_ls = acc_ls + jnp.sum(jax.nn.log_sigmoid(raw),
                                      axis=0, keepdims=True)
            y = jnp.concatenate([z1, z2], axis=-1)

    y_ref[0] = y.astype(y_ref.dtype)
    ld_ref[0] = ld_ref[0] + acc_ls


# ----------------------------------------------------------------------------
# Wrapper: tiling, specs, VMEM budget
# ----------------------------------------------------------------------------
def _pick_pixel_tile(P, row_bytes, max_block_bytes=2 << 20, cap=2048):
    """Largest divisor of P that is a multiple of 8 (or P itself) within budget."""
    limit = int(min(P, cap, max(8, max_block_bytes // max(row_bytes, 1))))
    for t in range(limit, 0, -1):
        if P % t == 0 and (t % 8 == 0 or t == P):
            return t
    return P


def run_level(x_nhwc, cond_nhwc, params):
    """Applies all FlowSteps of one level. Returns (y_nhwc, per-batch data logdet)."""
    N, H, W, C = x_nhwc.shape
    P = H * W
    c2 = C // 2
    Ccond = cond_nhwc.shape[-1]
    x = x_nhwc.reshape(N, P, C)
    cond = cond_nhwc.reshape(N, P, Ccond)

    row_bytes = 4 * (2 * C + Ccond)               # x + y + cond per pixel (f32)
    tp = _pick_pixel_tile(P, row_bytes)
    n_pt = P // tp

    anb, ans = params["an_bias"], params["an_scale"]
    winv = params["w_inv"]
    wz, wc, bc = params["w_coup_z"], params["w_coup_c"], params["b_coup"]

    weight_bytes = sum(int(a.size) * a.dtype.itemsize
                       for a in (anb, ans, winv, wz, wc, bc))
    block_bytes = tp * row_bytes + 4 * c2
    # Explicit VMEM budget (double-buffered blocks + resident weights + slack),
    # capped at 32 MiB so it is safe on v7x's 64 MiB physical VMEM.
    vmem_limit = int(min(32 << 20, 4 * (block_bytes + weight_bytes) + (4 << 20)))

    kernel = functools.partial(_level_kernel,
                               n_additional=params["n_additional"],
                               n_flow=params["n_flow"],
                               c2=c2)
    full = lambda n, t: (0, 0, 0)

    y, ld = pl.pallas_call(
        kernel,
        out_shape=(jax.ShapeDtypeStruct((N, P, C), jnp.float32),
                   jax.ShapeDtypeStruct((N, 1, c2), jnp.float32)),
        grid=(N, n_pt),
        in_specs=[
            pl.BlockSpec((1, tp, C), lambda n, t: (n, t, 0)),
            pl.BlockSpec((1, tp, Ccond), lambda n, t: (n, t, 0)),
            pl.BlockSpec(anb.shape, full),
            pl.BlockSpec(ans.shape, full),
            pl.BlockSpec(winv.shape, full),
            pl.BlockSpec(wz.shape, full),
            pl.BlockSpec(wc.shape, full),
            pl.BlockSpec(bc.shape, full),
        ],
        out_specs=(pl.BlockSpec((1, tp, C), lambda n, t: (n, t, 0)),
                   pl.BlockSpec((1, 1, c2), lambda n, t: (n, 0, 0))),
        compiler_params=pltpu.CompilerParams(
            dimension_semantics=("parallel", "arbitrary"),
            vmem_limit_bytes=vmem_limit),
    )(x, cond, anb, ans, winv, wz, wc, bc)

    y = y.reshape(N, H, W, C)
    ld_per_batch = jnp.sum(ld, axis=(1, 2))       # (N,) data-dependent logdet
    return y, ld_per_batch


# ----------------------------------------------------------------------------
# Glue (pure JAX): squeeze, parameter setup, level orchestration
# ----------------------------------------------------------------------------
def squeeze2d(x):
    """Glow squeeze, NHWC: (N,H,W,C) -> (N,H/2,W/2,4C)."""
    N, H, W, C = x.shape
    x = x.reshape(N, H // 2, 2, W // 2, 2, C)
    x = jnp.transpose(x, (0, 1, 3, 5, 2, 4))      # (N, H/2, W/2, C, 2, 2)
    return x.reshape(N, H // 2, W // 2, 4 * C)


def _init_level(key, channels, n_additional, n_flow, cond_channels, position):
    C = channels
    c2 = C // 2
    n_all = n_additional + n_flow
    assert n_all >= 1
    ks = jax.random.split(key, 5)

    an_logs = 0.05 * jax.random.normal(ks[0], (n_all, 1, C), jnp.float32)
    an_bias = 0.02 * jax.random.normal(ks[1], (n_all, 1, C), jnp.float32)

    # Orthogonal init for each invertible 1x1 conv.
    w_keys = jax.random.split(ks[2], n_all)
    w_inv = jnp.stack(
        [jnp.linalg.qr(jax.random.normal(k, (C, C), jnp.float32))[0]
         for k in w_keys])
    w_logdet = jnp.sum(jnp.linalg.slogdet(w_inv)[1])        # sum over steps

    nf = max(n_flow, 1)                                      # dummy if n_flow == 0
    w_coup_z = 0.05 * jax.random.normal(ks[3], (nf, c2, 2 * c2), jnp.float32)
    w_coup_c = 0.05 * jax.random.normal(ks[4], (nf, cond_channels, 2 * c2),
                                        jnp.float32)
    b_coup = jnp.zeros((nf, 1, 2 * c2), jnp.float32)

    # Data-independent per-pixel logdet (actnorm logs + invconv log|det W|).
    const_logdet = jnp.sum(an_logs) + w_logdet

    return dict(
        position=position, n_additional=n_additional, n_flow=n_flow,
        an_bias=an_bias, an_scale=jnp.exp(an_logs),
        w_inv=w_inv.astype(jnp.bfloat16),
        w_coup_z=w_coup_z.astype(jnp.bfloat16),
        w_coup_c=w_coup_c.astype(jnp.bfloat16),
        b_coup=b_coup,
        const_logdet=const_logdet,
    )


class ConditionalFlowPallas:
    def __init__(self, in_channels=3, n_levels=3, n_flow_steps=12,
                 n_additional_steps=2, n_conditional_channels=64, seed=42):
        self.n_levels = n_levels
        self.levels = []
        key = jax.random.PRNGKey(seed)
        current = in_channels
        for level in range(n_levels):
            current *= 4                                     # squeeze factor 2
            key, sub = jax.random.split(key)
            self.levels.append(
                _init_level(sub, channels=current,
                            n_additional=n_additional_steps,
                            n_flow=n_flow_steps,
                            cond_channels=n_conditional_channels,
                            position=f"feature_maps_{level + 1}"))

    def __call__(self, z=None, gt=None, conditional_features=None,
                 logdet=0.0, reverse=False):
        if reverse:
            # TODO(synk): decode/reverse path (inverse 1x1 conv, inverse coupling)
            # not implemented; only the forward (encode) semantics are required.
            raise NotImplementedError("reverse=True not implemented")
        return self.encode(gt, conditional_features, logdet)

    def encode(self, gt, rrdb_results, logdet=0.0):
        features = gt
        N = features.shape[0]
        logdet = jnp.zeros((N,), jnp.float32) + logdet
        for params in self.levels:
            features = squeeze2d(features)
            H, W = features.shape[1], features.shape[2]
            pixels = H * W
            cond = rrdb_results[params["position"]]          # NHWC, matching H, W
            features, ld_data = run_level(features, cond, params)
            logdet = logdet + pixels * params["const_logdet"] + ld_data
        return features, logdet


if __name__ == "__main__":
    # Small, self-consistent shapes.
    N, C_in, H, W = 2, 4, 16, 16
    n_levels, n_flow_steps, n_additional_steps, n_cond = 2, 2, 1, 16

    flow = ConditionalFlowPallas(in_channels=C_in, n_levels=n_levels,
                                 n_flow_steps=n_flow_steps,
                                 n_additional_steps=n_additional_steps,
                                 n_conditional_channels=n_cond)

    key = jax.random.PRNGKey(0)
    k1, k2, k3 = jax.random.split(key, 3)
    gt = jax.random.normal(k1, (N, H, W, C_in), jnp.float32)           # NHWC
    conditional_features = {
        "feature_maps_1": jax.random.normal(k2, (N, H // 2, W // 2, n_cond),
                                            jnp.float32),
        "feature_maps_2": jax.random.normal(k3, (N, H // 4, W // 4, n_cond),
                                            jnp.float32),
    }

    z, logdet = flow(gt=gt, conditional_features=conditional_features,
                     logdet=0.0, reverse=False)
    jax.block_until_ready((z, logdet))

    assert z.shape == (N, H // (2 ** n_levels), W // (2 ** n_levels),
                       C_in * 4 ** n_levels)
    assert logdet.shape == (N,)
    assert bool(jnp.all(jnp.isfinite(z)))
    assert bool(jnp.all(jnp.isfinite(logdet)))
    print("KERNEL_OK")
</pallas_src>

<mosaic_0001>
module attributes {stable_mosaic.version = 11 : i64} {
  func.func @_level_kernel(%arg0: i32, %arg1: i32, %arg2: memref<1x64x16xf32, #tpu.memory_space<vmem>>, %arg3: memref<1x64x16xf32, #tpu.memory_space<vmem>>, %arg4: memref<3x1x16xf32, #tpu.memory_space<vmem>>, %arg5: memref<3x1x16xf32, #tpu.memory_space<vmem>>, %arg6: memref<3x16x16xbf16, #tpu.memory_space<vmem>>, %arg7: memref<2x8x16xbf16, #tpu.memory_space<vmem>>, %arg8: memref<2x16x16xbf16, #tpu.memory_space<vmem>>, %arg9: memref<2x1x16xf32, #tpu.memory_space<vmem>>, %arg10: memref<1x64x16xf32, #tpu.memory_space<vmem>>, %arg11: memref<1x1x8xf32, #tpu.memory_space<vmem>>) attributes {dimension_semantics = [#tpu.dimension_semantics<parallel>, #tpu.dimension_semantics<arbitrary>], iteration_bounds = array<i64: 2, 1>, scalar_prefetch = 0 : i64, scratch_operands = 0 : i64, tpu.core_type = #tpu.core_type<tc>, window_params = [{transform_indices = @transform_0, window_bounds = array<i64: 1, 64, 16>}, {transform_indices = @transform_1, window_bounds = array<i64: 1, 64, 16>}, {pipeline_mode = #tpu.pipeline_mode<synchronous>, transform_indices = @transform_2, window_bounds = array<i64: 3, 1, 16>}, {pipeline_mode = #tpu.pipeline_mode<synchronous>, transform_indices = @transform_3, window_bounds = array<i64: 3, 1, 16>}, {pipeline_mode = #tpu.pipeline_mode<synchronous>, transform_indices = @transform_4, window_bounds = array<i64: 3, 16, 16>}, {pipeline_mode = #tpu.pipeline_mode<synchronous>, transform_indices = @transform_5, window_bounds = array<i64: 2, 8, 16>}, {pipeline_mode = #tpu.pipeline_mode<synchronous>, transform_indices = @transform_6, window_bounds = array<i64: 2, 16, 16>}, {pipeline_mode = #tpu.pipeline_mode<synchronous>, transform_indices = @transform_7, window_bounds = array<i64: 2, 1, 16>}, {transform_indices = @transform_8, window_bounds = array<i64: 1, 64, 16>}, {transform_indices = @transform_9, window_bounds = array<i64: 1, 1, 8>}]} {
    %c0_i32 = arith.constant 0 : i32
    %0 = arith.cmpi eq, %arg1, %c0_i32 : i32
    %1 = arith.extui %0 : i1 to i32
    %c0_i32_0 = arith.constant 0 : i32
    %2 = arith.cmpi ne, %1, %c0_i32_0 : i32
    scf.if %2 {
      %cst_79 = arith.constant 0.000000e+00 : f32
      %148 = vector.broadcast %cst_79 : f32 to vector<1x1x8xf32>
      %c0_80 = arith.constant 0 : index
      %c0_81 = arith.constant 0 : index
      %c0_82 = arith.constant 0 : index
      %149 = vector.load %arg11[%c0_80, %c0_81, %c0_82] : memref<1x1x8xf32, #tpu.memory_space<vmem>>, vector<1x1x8xf32>
      tpu.vector_store %arg11[%c0_80, %c0_81, %c0_82], %148 {strides = array<i32>} : memref<1x1x8xf32, #tpu.memory_space<vmem>>, vector<1x1x8xf32>,
    } else {
    }
    %c0 = arith.constant 0 : index
    %c0_1 = arith.constant 0 : index
    %c0_2 = arith.constant 0 : index
    %3 = vector.load %arg2[%c0, %c0_1, %c0_2] : memref<1x64x16xf32, #tpu.memory_space<vmem>>, vector<1x64x16xf32>
    %4 = vector.shape_cast %3 : vector<1x64x16xf32> to vector<64x16xf32>
    %c0_3 = arith.constant 0 : index
    %c0_4 = arith.constant 0 : index
    %c0_5 = arith.constant 0 : index
    %5 = vector.load %arg3[%c0_3, %c0_4, %c0_5] : memref<1x64x16xf32, #tpu.memory_space<vmem>>, vector<1x64x16xf32>
    %6 = vector.shape_cast %5 : vector<1x64x16xf32> to vector<64x16xf32>
    %7 = arith.truncf %6 : vector<64x16xf32> to vector<64x16xbf16>
    %cst = arith.constant 0.000000e+00 : f32
    %8 = vector.broadcast %cst : f32 to vector<1x8xf32>
    %c0_6 = arith.constant 0 : index
    %c0_7 = arith.constant 0 : index
    %c0_8 = arith.constant 0 : index
    %9 = vector.load %arg4[%c0_6, %c0_7, %c0_8] : memref<3x1x16xf32, #tpu.memory_space<vmem>>, vector<1x1x16xf32>
    %10 = vector.shape_cast %9 : vector<1x1x16xf32> to vector<1x16xf32>
    %11 = vector.broadcast %10 : vector<1x16xf32> to vector<64x16xf32>
    %12 = arith.addf %4, %11 : vector<64x16xf32>
    %c0_9 = arith.constant 0 : index
    %c0_10 = arith.constant 0 : index
    %c0_11 = arith.constant 0 : index
    %13 = vector.load %arg5[%c0_9, %c0_10, %c0_11] : memref<3x1x16xf32, #tpu.memory_space<vmem>>, vector<1x1x16xf32>
    %14 = vector.shape_cast %13 : vector<1x1x16xf32> to vector<1x16xf32>
    %15 = vector.broadcast %14 : vector<1x16xf32> to vector<64x16xf32>
    %16 = arith.mulf %12, %15 : vector<64x16xf32>
    %17 = arith.truncf %16 : vector<64x16xf32> to vector<64x16xbf16>
    %c0_12 = arith.constant 0 : index
    %c0_13 = arith.constant 0 : index
    %c0_14 = arith.constant 0 : index
    %18 = vector.load %arg6[%c0_12, %c0_13, %c0_14] : memref<3x16x16xbf16, #tpu.memory_space<vmem>>, vector<1x16x16xbf16>
    %19 = vector.shape_cast %18 : vector<1x16x16xbf16> to vector<16x16xbf16>
    %cst_15 = arith.constant dense<0.000000e+00> : vector<64x16xf32>
    %20 = tpu.matmul %17, %19, %cst_15 {dimension_numbers = #tpu.dot_dimension_numbers<[1], [0], [0], [1], [0, 0, 1, 1], [], []>} : vector<64x16xbf16>, vector<16x16xbf16>, vector<64x16xf32> -> vector<64x16xf32>
    %c1 = arith.constant 1 : index
    %c0_16 = arith.constant 0 : index
    %c0_17 = arith.constant 0 : index
    %21 = vector.load %arg4[%c1, %c0_16, %c0_17] : memref<3x1x16xf32, #tpu.memory_space<vmem>>, vector<1x1x16xf32>
    %22 = vector.shape_cast %21 : vector<1x1x16xf32> to vector<1x16xf32>
    %23 = vector.broadcast %22 : vector<1x16xf32> to vector<64x16xf32>
    %24 = arith.addf %20, %23 : vector<64x16xf32>
    %c1_18 = arith.constant 1 : index
    %c0_19 = arith.constant 0 : index
    %c0_20 = arith.constant 0 : index
    %25 = vector.load %arg5[%c1_18, %c0_19, %c0_20] : memref<3x1x16xf32, #tpu.memory_space<vmem>>, vector<1x1x16xf32>
    %26 = vector.shape_cast %25 : vector<1x1x16xf32> to vector<1x16xf32>
    %27 = vector.broadcast %26 : vector<1x16xf32> to vector<64x16xf32>
    %28 = arith.mulf %24, %27 : vector<64x16xf32>
    %29 = arith.truncf %28 : vector<64x16xf32> to vector<64x16xbf16>
    %c1_21 = arith.constant 1 : index
    %c0_22 = arith.constant 0 : index
    %c0_23 = arith.constant 0 : index
    %30 = vector.load %arg6[%c1_21, %c0_22, %c0_23] : memref<3x16x16xbf16, #tpu.memory_space<vmem>>, vector<1x16x16xbf16>
    %31 = vector.shape_cast %30 : vector<1x16x16xbf16> to vector<16x16xbf16>
    %cst_24 = arith.constant dense<0.000000e+00> : vector<64x16xf32>
    %32 = tpu.matmul %29, %31, %cst_24 {dimension_numbers = #tpu.dot_dimension_numbers<[1], [0], [0], [1], [0, 0, 1, 1], [], []>} : vector<64x16xbf16>, vector<16x16xbf16>, vector<64x16xf32> -> vector<64x16xf32>
    %33 = vector.extract_strided_slice %32 {offsets = [0, 0], sizes = [64, 8], strides = [1, 1]} : vector<64x16xf32> to vector<64x8xf32>
    %34 = vector.extract_strided_slice %32 {offsets = [0, 8], sizes = [64, 8], strides = [1, 1]} : vector<64x16xf32> to vector<64x8xf32>
    %35 = arith.truncf %33 : vector<64x8xf32> to vector<64x8xbf16>
    %c0_25 = arith.constant 0 : index
    %c0_26 = arith.constant 0 : index
    %c0_27 = arith.constant 0 : index
    %36 = vector.load %arg7[%c0_25, %c0_26, %c0_27] : memref<2x8x16xbf16, #tpu.memory_space<vmem>>, vector<1x8x16xbf16>
    %37 = vector.shape_cast %36 : vector<1x8x16xbf16> to vector<8x16xbf16>
    %cst_28 = arith.constant dense<0.000000e+00> : vector<64x16xf32>
    %38 = tpu.matmul %35, %37, %cst_28 {dimension_numbers = #tpu.dot_dimension_numbers<[1], [0], [0], [1], [0, 0, 1, 1], [], []>} : vector<64x8xbf16>, vector<8x16xbf16>, vector<64x16xf32> -> vector<64x16xf32>
    %c0_29 = arith.constant 0 : index
    %c0_30 = arith.constant 0 : index
    %c0_31 = arith.constant 0 : index
    %39 = vector.load %arg8[%c0_29, %c0_30, %c0_31] : memref<2x16x16xbf16, #tpu.memory_space<vmem>>, vector<1x16x16xbf16>
    %40 = vector.shape_cast %39 : vector<1x16x16xbf16> to vector<16x16xbf16>
    %cst_32 = arith.constant dense<0.000000e+00> : vector<64x16xf32>
    %41 = tpu.matmul %7, %40, %cst_32 {dimension_numbers = #tpu.dot_dimension_numbers<[1], [0], [0], [1], [0, 0, 1, 1], [], []>} : vector<64x16xbf16>, vector<16x16xbf16>, vector<64x16xf32> -> vector<64x16xf32>
    %42 = arith.addf %38, %41 : vector<64x16xf32>
    %c0_33 = arith.constant 0 : index
    %c0_34 = arith.constant 0 : index
    %c0_35 = arith.constant 0 : index
    %43 = vector.load %arg9[%c0_33, %c0_34, %c0_35] : memref<2x1x16xf32, #tpu.memory_space<vmem>>, vector<1x1x16xf32>
    %44 = vector.shape_cast %43 : vector<1x1x16xf32> to vector<1x16xf32>
    %45 = vector.broadcast %44 : vector<1x16xf32> to vector<64x16xf32>
    %46 = arith.addf %42, %45 : vector<64x16xf32>
    %47 = vector.extract_strided_slice %46 {offsets = [0, 0], sizes = [64, 8], strides = [1, 1]} : vector<64x16xf32> to vector<64x8xf32>
    %48 = vector.extract_strided_slice %46 {offsets = [0, 8], sizes = [64, 8], strides = [1, 1]} : vector<64x16xf32> to vector<64x8xf32>
    %cst_36 = arith.constant 2.000000e+00 : f32
    %49 = vector.broadcast %cst_36 : f32 to vector<64x8xf32>
    %50 = arith.addf %48, %49 : vector<64x8xf32>
    %51 = arith.negf %50 : vector<64x8xf32>
    %52 = math.exp %51 : vector<64x8xf32>
    %cst_37 = arith.constant 1.000000e+00 : f32
    %53 = vector.broadcast %cst_37 : f32 to vector<64x8xf32>
    %54 = arith.addf %53, %52 : vector<64x8xf32>
    %55 = arith.divf %53, %54 : vector<64x8xf32>
    %56 = arith.addf %34, %47 : vector<64x8xf32>
    %57 = arith.mulf %56, %55 : vector<64x8xf32>
    %cst_38 = arith.constant 0.000000e+00 : f32
    %58 = vector.broadcast %cst_38 : f32 to vector<64x8xf32>
    %59 = arith.subf %58, %50 : vector<64x8xf32>
    %cst_39 = arith.constant 0.000000e+00 : f32
    %60 = vector.broadcast %cst_39 : f32 to vector<64x8xf32>
    %61 = arith.maximumf %59, %60 : vector<64x8xf32>
    %62 = vector.broadcast %cst_39 : f32 to vector<64x8xf32>
    %63 = arith.subf %59, %62 : vector<64x8xf32>
    %64 = arith.cmpf one, %63, %63 : vector<64x8xf32>
    %65 = vector.broadcast %cst_39 : f32 to vector<64x8xf32>
    %66 = arith.addf %59, %65 : vector<64x8xf32>
    %67 = math.absf %63 : vector<64x8xf32>
    %cst_40 = arith.constant 0.000000e+00 : f32
    %68 = vector.broadcast %cst_40 : f32 to vector<64x8xf32>
    %69 = arith.subf %68, %67 : vector<64x8xf32>
    %70 = math.exp %69 : vector<64x8xf32>
    %71 = math.log1p %70 : vector<64x8xf32>
    %72 = arith.addf %61, %71 : vector<64x8xf32>
    %73 = arith.select %64, %66, %72 : vector<64x8xi1>, vector<64x8xf32>
    %cst_41 = arith.constant 0.000000e+00 : f32
    %74 = vector.broadcast %cst_41 : f32 to vector<64x8xf32>
    %75 = arith.subf %74, %73 : vector<64x8xf32>
    %cst_42 = arith.constant dense<0.000000e+00> : vector<8xf32>
    %76 = vector.multi_reduction <add>, %75, %cst_42 [0] : vector<64x8xf32> to vector<8xf32>
    %77 = vector.shape_cast %76 : vector<8xf32> to vector<1x8xf32>
    %78 = arith.addf %8, %77 : vector<1x8xf32>
    %79 = tpu.concatenate %33, %57 in 1 : vector<64x8xf32>, vector<64x8xf32> -> vector<64x16xf32>
    %c2 = arith.constant 2 : index
    %c0_43 = arith.constant 0 : index
    %c0_44 = arith.constant 0 : index
    %80 = vector.load %arg4[%c2, %c0_43, %c0_44] : memref<3x1x16xf32, #tpu.memory_space<vmem>>, vector<1x1x16xf32>
    %81 = vector.shape_cast %80 : vector<1x1x16xf32> to vector<1x16xf32>
    %82 = vector.broadcast %81 : vector<1x16xf32> to vector<64x16xf32>
    %83 = arith.addf %79, %82 : vector<64x16xf32>
    %c2_45 = arith.constant 2 : index
    %c0_46 = arith.constant 0 : index
    %c0_47 = arith.constant 0 : index
    %84 = vector.load %arg5[%c2_45, %c0_46, %c0_47] : memref<3x1x16xf32, #tpu.memory_space<vmem>>, vector<1x1x16xf32>
    %85 = vector.shape_cast %84 : vector<1x1x16xf32> to vector<1x16xf32>
    %86 = vector.broadcast %85 : vector<1x16xf32> to vector<64x16xf32>
    %87 = arith.mulf %83, %86 : vector<64x16xf32>
    %88 = arith.truncf %87 : vector<64x16xf32> to vector<64x16xbf16>
    %c2_48 = arith.constant 2 : index
    %c0_49 = arith.constant 0 : index
    %c0_50 = arith.constant 0 : index
    %89 = vector.load %arg6[%c2_48, %c0_49, %c0_50] : memref<3x16x16xbf16, #tpu.memory_space<vmem>>, vector<1x16x16xbf16>
    %90 = vector.shape_cast %89 : vector<1x16x16xbf16> to vector<16x16xbf16>
    %cst_51 = arith.constant dense<0.000000e+00> : vector<64x16xf32>
    %91 = tpu.matmul %88, %90, %cst_51 {dimension_numbers = #tpu.dot_dimension_numbers<[1], [0], [0], [1], [0, 0, 1, 1], [], []>} : vector<64x16xbf16>, vector<16x16xbf16>, vector<64x16xf32> -> vector<64x16xf32>
    %92 = vector.extract_strided_slice %91 {offsets = [0, 0], sizes = [64, 8], strides = [1, 1]} : vector<64x16xf32> to vector<64x8xf32>
    %93 = vector.extract_strided_slice %91 {offsets = [0, 8], sizes = [64, 8], strides = [1, 1]} : vector<64x16xf32> to vector<64x8xf32>
    %94 = arith.truncf %92 : vector<64x8xf32> to vector<64x8xbf16>
    %c1_52 = arith.constant 1 : index
    %c0_53 = arith.constant 0 : index
    %c0_54 = arith.constant 0 : index
    %95 = vector.load %arg7[%c1_52, %c0_53, %c0_54] : memref<2x8x16xbf16, #tpu.memory_space<vmem>>, vector<1x8x16xbf16>
    %96 = vector.shape_cast %95 : vector<1x8x16xbf16> to vector<8x16xbf16>
    %cst_55 = arith.constant dense<0.000000e+00> : vector<64x16xf32>
    %97 = tpu.matmul %94, %96, %cst_55 {dimension_numbers = #tpu.dot_dimension_numbers<[1], [0], [0], [1], [0, 0, 1, 1], [], []>} : vector<64x8xbf16>, vector<8x16xbf16>, vector<64x16xf32> -> vector<64x16xf32>
    %c1_56 = arith.constant 1 : index
    %c0_57 = arith.constant 0 : index
    %c0_58 = arith.constant 0 : index
    %98 = vector.load %arg8[%c1_56, %c0_57, %c0_58] : memref<2x16x16xbf16, #tpu.memory_space<vmem>>, vector<1x16x16xbf16>
    %99 = vector.shape_cast %98 : vector<1x16x16xbf16> to vector<16x16xbf16>
    %cst_59 = arith.constant dense<0.000000e+00> : vector<64x16xf32>
    %100 = tpu.matmul %7, %99, %cst_59 {dimension_numbers = #tpu.dot_dimension_numbers<[1], [0], [0], [1], [0, 0, 1, 1], [], []>} : vector<64x16xbf16>, vector<16x16xbf16>, vector<64x16xf32> -> vector<64x16xf32>
    %101 = arith.addf %97, %100 : vector<64x16xf32>
    %c1_60 = arith.constant 1 : index
    %c0_61 = arith.constant 0 : index
    %c0_62 = arith.constant 0 : index
    %102 = vector.load %arg9[%c1_60, %c0_61, %c0_62] : memref<2x1x16xf32, #tpu.memory_space<vmem>>, vector<1x1x16xf32>
    %103 = vector.shape_cast %102 : vector<1x1x16xf32> to vector<1x16xf32>
    %104 = vector.broadcast %103 : vector<1x16xf32> to vector<64x16xf32>
    %105 = arith.addf %101, %104 : vector<64x16xf32>
    %106 = vector.extract_strided_slice %105 {offsets = [0, 0], sizes = [64, 8], strides = [1, 1]} : vector<64x16xf32> to vector<64x8xf32>
    %107 = vector.extract_strided_slice %105 {offsets = [0, 8], sizes = [64, 8], strides = [1, 1]} : vector<64x16xf32> to vector<64x8xf32>
    %cst_63 = arith.constant 2.000000e+00 : f32
    %108 = vector.broadcast %cst_63 : f32 to vector<64x8xf32>
    %109 = arith.addf %107, %108 : vector<64x8xf32>
    %110 = arith.negf %109 : vector<64x8xf32>
    %111 = math.exp %110 : vector<64x8xf32>
    %cst_64 = arith.constant 1.000000e+00 : f32
    %112 = vector.broadcast %cst_64 : f32 to vector<64x8xf32>
    %113 = arith.addf %112, %111 : vector<64x8xf32>
    %114 = arith.divf %112, %113 : vector<64x8xf32>
    %115 = arith.addf %93, %106 : vector<64x8xf32>
    %116 = arith.mulf %115, %114 : vector<64x8xf32>
    %cst_65 = arith.constant 0.000000e+00 : f32
    %117 = vector.broadcast %cst_65 : f32 to vector<64x8xf32>
    %118 = arith.subf %117, %109 : vector<64x8xf32>
    %cst_66 = arith.constant 0.000000e+00 : f32
    %119 = vector.broadcast %cst_66 : f32 to vector<64x8xf32>
    %120 = arith.maximumf %118, %119 : vector<64x8xf32>
    %121 = vector.broadcast %cst_66 : f32 to vector<64x8xf32>
    %122 = arith.subf %118, %121 : vector<64x8xf32>
    %123 = arith.cmpf one, %122, %122 : vector<64x8xf32>
    %124 = vector.broadcast %cst_66 : f32 to vector<64x8xf32>
    %125 = arith.addf %118, %124 : vector<64x8xf32>
    %126 = math.absf %122 : vector<64x8xf32>
    %cst_67 = arith.constant 0.000000e+00 : f32
    %127 = vector.broadcast %cst_67 : f32 to vector<64x8xf32>
    %128 = arith.subf %127, %126 : vector<64x8xf32>
    %129 = math.exp %128 : vector<64x8xf32>
    %130 = math.log1p %129 : vector<64x8xf32>
    %131 = arith.addf %120, %130 : vector<64x8xf32>
    %132 = arith.select %123, %125, %131 : vector<64x8xi1>, vector<64x8xf32>
    %cst_68 = arith.constant 0.000000e+00 : f32
    %133 = vector.broadcast %cst_68 : f32 to vector<64x8xf32>
    %134 = arith.subf %133, %132 : vector<64x8xf32>
    %cst_69 = arith.constant dense<0.000000e+00> : vector<8xf32>
    %135 = vector.multi_reduction <add>, %134, %cst_69 [0] : vector<64x8xf32> to vector<8xf32>
    %136 = vector.shape_cast %135 : vector<8xf32> to vector<1x8xf32>
    %137 = arith.addf %78, %136 : vector<1x8xf32>
    %138 = tpu.concatenate %92, %116 in 1 : vector<64x8xf32>, vector<64x8xf32> -> vector<64x16xf32>
    %c0_70 = arith.constant 0 : index
    %c0_71 = arith.constant 0 : index
    %c0_72 = arith.constant 0 : index
    %139 = vector.load %arg10[%c0_70, %c0_71, %c0_72] : memref<1x64x16xf32, #tpu.memory_space<vmem>>, vector<1x64x16xf32>
    %140 = vector.shape_cast %139 : vector<1x64x16xf32> to vector<64x16xf32>
    %141 = vector.shape_cast %138 : vector<64x16xf32> to vector<1x64x16xf32>
    tpu.vector_store %arg10[%c0_70, %c0_71, %c0_72], %141 {strides = array<i32>} : memref<1x64x16xf32, #tpu.memory_space<vmem>>, vector<1x64x16xf32>,
    %c0_73 = arith.constant 0 : index
    %c0_74 = arith.constant 0 : index
    %c0_75 = arith.constant 0 : index
    %142 = vector.load %arg11[%c0_73, %c0_74, %c0_75] : memref<1x1x8xf32, #tpu.memory_space<vmem>>, vector<1x1x8xf32>
    %143 = vector.shape_cast %142 : vector<1x1x8xf32> to vector<1x8xf32>
    %144 = arith.addf %143, %137 : vector<1x8xf32>
    %c0_76 = arith.constant 0 : index
    %c0_77 = arith.constant 0 : index
    %c0_78 = arith.constant 0 : index
    %145 = vector.load %arg11[%c0_76, %c0_77, %c0_78] : memref<1x1x8xf32, #tpu.memory_space<vmem>>, vector<1x1x8xf32>
    %146 = vector.shape_cast %145 : vector<1x1x8xf32> to vector<1x8xf32>
    %147 = vector.shape_cast %144 : vector<1x8xf32> to vector<1x1x8xf32>
    tpu.vector_store %arg11[%c0_76, %c0_77, %c0_78], %147 {strides = array<i32>} : memref<1x1x8xf32, #tpu.memory_space<vmem>>, vector<1x1x8xf32>,
    return
  }
  func.func @transform_0(%arg0: i32, %arg1: i32) -> (i32, i32, i32) {
    %c0_i32 = arith.constant 0 : i32
    %c0_i32_0 = arith.constant 0 : i32
    return %arg0, %arg1, %c0_i32 : i32, i32, i32
  }
  func.func @transform_1(%arg0: i32, %arg1: i32) -> (i32, i32, i32) {
    %c0_i32 = arith.constant 0 : i32
    %c0_i32_0 = arith.constant 0 : i32
    return %arg0, %arg1, %c0_i32 : i32, i32, i32
  }
  func.func @transform_2(%arg0: i32, %arg1: i32) -> (i32, i32, i32) {
    %c0_i32 = arith.constant 0 : i32
    %c0_i32_0 = arith.constant 0 : i32
    %c0_i32_1 = arith.constant 0 : i32
    %c0_i32_2 = arith.constant 0 : i32
    return %c0_i32, %c0_i32_0, %c0_i32_1 : i32, i32, i32
  }
  func.func @transform_3(%arg0: i32, %arg1: i32) -> (i32, i32, i32) {
    %c0_i32 = arith.constant 0 : i32
    %c0_i32_0 = arith.constant 0 : i32
    %c0_i32_1 = arith.constant 0 : i32
    %c0_i32_2 = arith.constant 0 : i32
    return %c0_i32, %c0_i32_0, %c0_i32_1 : i32, i32, i32
  }
  func.func @transform_4(%arg0: i32, %arg1: i32) -> (i32, i32, i32) {
    %c0_i32 = arith.constant 0 : i32
    %c0_i32_0 = arith.constant 0 : i32
    %c0_i32_1 = arith.constant 0 : i32
    %c0_i32_2 = arith.constant 0 : i32
    return %c0_i32, %c0_i32_0, %c0_i32_1 : i32, i32, i32
  }
  func.func @transform_5(%arg0: i32, %arg1: i32) -> (i32, i32, i32) {
    %c0_i32 = arith.constant 0 : i32
    %c0_i32_0 = arith.constant 0 : i32
    %c0_i32_1 = arith.constant 0 : i32
    %c0_i32_2 = arith.constant 0 : i32
    return %c0_i32, %c0_i32_0, %c0_i32_1 : i32, i32, i32
  }
  func.func @transform_6(%arg0: i32, %arg1: i32) -> (i32, i32, i32) {
    %c0_i32 = arith.constant 0 : i32
    %c0_i32_0 = arith.constant 0 : i32
    %c0_i32_1 = arith.constant 0 : i32
    %c0_i32_2 = arith.constant 0 : i32
    return %c0_i32, %c0_i32_0, %c0_i32_1 : i32, i32, i32
  }
  func.func @transform_7(%arg0: i32, %arg1: i32) -> (i32, i32, i32) {
    %c0_i32 = arith.constant 0 : i32
    %c0_i32_0 = arith.constant 0 : i32
    %c0_i32_1 = arith.constant 0 : i32
    %c0_i32_2 = arith.constant 0 : i32
    return %c0_i32, %c0_i32_0, %c0_i32_1 : i32, i32, i32
  }
  func.func @transform_8(%arg0: i32, %arg1: i32) -> (i32, i32, i32) {
    %c0_i32 = arith.constant 0 : i32
    %c0_i32_0 = arith.constant 0 : i32
    return %arg0, %arg1, %c0_i32 : i32, i32, i32
  }
  func.func @transform_9(%arg0: i32, %arg1: i32) -> (i32, i32, i32) {
    %c0_i32 = arith.constant 0 : i32
    %c0_i32_0 = arith.constant 0 : i32
    %c0_i32_1 = arith.constant 0 : i32
    return %arg0, %c0_i32, %c0_i32_0 : i32, i32, i32
  }
}

</mosaic_0001>

<llo_original>
// kernel: tpu_custom_call.1
$region0: #{tpu_custom_call.1}
  #allocation0 [shape = 'u32[]', space=smem, size = 0x4, offset = 0x4, fixed_abs, tag = 'smem constant byte address 0x4 - core index']
  #allocation1 [shape = 'u32[144,128]{1,0:T(1,128)}', space=vmem, size = 0x12000, scoped, tag = 'internal scratch']
  %s0 = inlined_call_operand.vmem [shape: f32[2,64,16], index: 0, kind: input, shape index: {}]
  %s1 = inlined_call_operand.vmem [shape: f32[2,64,16], index: 1, kind: input, shape index: {}]
  %s2 = inlined_call_operand.vmem [shape: f32[3,1,16], index: 2, kind: input, shape index: {}]
  %s3 = inlined_call_operand.vmem [shape: f32[3,1,16], index: 3, kind: input, shape index: {}]
  %s4 = inlined_call_operand.vmem [shape: bf16[3,16,16], index: 4, kind: input, shape index: {}]
  %s5 = inlined_call_operand.vmem [shape: bf16[2,8,16], index: 5, kind: input, shape index: {}]
  %s6 = inlined_call_operand.vmem [shape: bf16[2,16,16], index: 6, kind: input, shape index: {}]
  %s7 = inlined_call_operand.vmem [shape: f32[2,1,16], index: 7, kind: input, shape index: {}]
  %s8 = inlined_call_operand.vmem [shape: f32[2,64,16], index: 8, kind: output, shape index: {0}]
  %s9 = inlined_call_operand.hbm [shape: f32[2,1,8], index: 9, kind: output, shape index: {1}]
  %10 = xla_tuple %s8, %s9
  %s11 = sld [smem:[#allocation0]]
  $region77: #{tpu_custom_call.1} parent=0
    _
  %s13 = ssub.s32 1, %s11
  %s14 = scalar_select 0, %s13, %s11
  $region1: #{tpu_custom_call.1} parent=0
    #allocation2 [shape = 'u8[1024]{0}', space=vmem, size = 0x400, scoped, tag = 'output window, operand 1']
    #allocation3 [shape = 's32[2]{0}', space=sflag, size = 0x8, scoped, tag = 'scoped memory for tpu_custom_call.1']
    %15 = vsyncpa [#allocation3], 0
    %s16 = scalar_lea.sflag [#allocation3], 1
    %17 = vsyncpa %s16, 0
    loop: start=0, step=1, limit=4
    $region2: #{tpu_custom_call.1} parent=1 // loop_pre_header
      _
    $region3: #{tpu_custom_call.1} parent=1 // loop_header
      %s19 = sphi 0, %s23
      %p20 = scmp.ge.s32.totalorder %s19, 4
      %s26 = sphi 0, %s38
      %s27 = sphi 0, %s34
      %s28 = sphi 0, %s26
      %s29 = sphi 0, %s27
      %s30 = sphi 0, %s28
      %s31 = sphi 0, %s29
      %s43 = sphi 0, %s45
      %s46 = sphi 0, %s43
      %s47 = sphi 0, %s46
      %s63 = sphi 0, %s47
      %s71 = sphi 0, %s73
      %s74 = sphi 0, %s71
      %s75 = sphi 0, %s74
      %s91 = sphi 0, %s75
      %s95 = sphi 0, %s95
      %s97 = sphi 0, %s95
      %s98 = sphi 0, %s97
      %s112 = sphi 0, %s98
      %s116 = sphi 0, %s116
      %s118 = sphi 0, %s116
      %s119 = sphi 0, %s118
      %s133 = sphi 0, %s119
      %s137 = sphi 0, %s137
      %s139 = sphi 0, %s137
      %s140 = sphi 0, %s139
      %s154 = sphi 0, %s140
      %s158 = sphi 0, %s158
      %s160 = sphi 0, %s158
      %s161 = sphi 0, %s160
      %s175 = sphi 0, %s161
      %s179 = sphi 0, %s179
      %s181 = sphi 0, %s179
      %s182 = sphi 0, %s181
      %s196 = sphi 0, %s182
      %s200 = sphi 0, %s200
      %s202 = sphi 0, %s200
      %s203 = sphi 0, %s202
      %s217 = sphi 0, %s203
      %s225 = sphi 0, %s227
      %s228 = sphi 0, %s225
      %s229 = sphi 0, %s228
      %s245 = sphi 0, %s229
      %s251 = sphi 0, %s253
      %s254 = sphi 0, %s251
      %s255 = sphi 0, %s254
      %s271 = sphi 0, %s255
    $region4: #{tpu_custom_call.1} parent=1 // loop_header_branch
      %22 = sbr.rel (%p20) target = $region8
    $region5: #{tpu_custom_call.1} parent=1 // loop_body
      %s24 = ssub.s32 %s19, 1
      %s25 = ssub.s32 %s19, 2
      %s32 = sadd.s32 1, %s27
      %p33 = scmp.ge.s32.totalorder %s32, 1
      %s34 = scalar_select %p33, 0, %s32
      %s35 = sadd.s32 1, %s26
      %s36 = scalar_select %p33, %s35, %s26
      %p37 = scmp.ge.s32.totalorder %s36, 2
      %s38 = scalar_select %p37, 0, %s36
      %s39 = ssub.s32 %s26, %s38
      %s40 = ssub.s32 %s27, %s34
      %s41 = sor.u32 %s39, %s40
      %p42 = scmp.eq.s32.totalorder %s41, 0
      %s44 = sadd.s32 %s43, 1
      %s45 = scalar_select %p42, %s43, %s44
      %p48 = pneg %p42
      %p49 = scmp.eq.s32.totalorder %s19, 1
      %p50 = por %p48, %p49
      %p51 = scmp.ne.s32.totalorder %s43, %s46
      %p52 = scmp.eq.s32.totalorder %s19, 0
      %p53 = por %p51, %p52
      %p54 = scmp.ne.s32.totalorder %s43, %s46
      %p55 = scmp.eq.s32.totalorder %s24, 1
      %p56 = por %p54, %p55
      %p57 = scmp.ne.s32.totalorder %s46, %s47
      %p58 = scmp.eq.s32.totalorder %s24, 0
      %p59 = por %p57, %p58
      %p60 = scmp.ne.s32.totalorder %s46, %s47
      %p61 = scmp.eq.s32.totalorder %s25, 1
      %p62 = por %p60, %p61
      %p64 = scmp.ne.s32.totalorder %s47, %s63
      %p65 = scmp.eq.s32.totalorder %s25, 0
      %p66 = por %p64, %p65
      %s67 = ssub.s32 %s26, %s38
      %s68 = ssub.s32 %s27, %s34
      %s69 = sor.u32 %s67, %s68
      %p70 = scmp.eq.s32.totalorder %s69, 0
      %s72 = sadd.s32 %s71, 1
      %s73 = scalar_select %p70, %s71, %s72
      %p76 = pneg %p70
      %p77 = scmp.eq.s32.totalorder %s19, 1
      %p78 = por %p76, %p77
      %p79 = scmp.ne.s32.totalorder %s71, %s74
      %p80 = scmp.eq.s32.totalorder %s19, 0
      %p81 = por %p79, %p80
      %p82 = scmp.ne.s32.totalorder %s71, %s74
      %p83 = scmp.eq.s32.totalorder %s24, 1
      %p84 = por %p82, %p83
      %p85 = scmp.ne.s32.totalorder %s74, %s75
      %p86 = scmp.eq.s32.totalorder %s24, 0
      %p87 = por %p85, %p86
      %p88 = scmp.ne.s32.totalorder %s74, %s75
      %p89 = scmp.eq.s32.totalorder %s25, 1
      %p90 = por %p88, %p89
      %p92 = scmp.ne.s32.totalorder %s75, %s91
      %p93 = scmp.eq.s32.totalorder %s25, 0
      %p94 = por %p92, %p93
      %s96 = sadd.s32 %s95, 1
      %p99 = scmp.eq.s32.totalorder %s19, 1
      %p100 = scmp.ne.s32.totalorder %s95, %s97
      %p101 = scmp.eq.s32.totalorder %s19, 0
      %p102 = por %p100, %p101
      %p103 = scmp.ne.s32.totalorder %s95, %s97
      %p104 = scmp.eq.s32.totalorder %s24, 1
      %p105 = por %p103, %p104
      %p106 = scmp.ne.s32.totalorder %s97, %s98
      %p107 = scmp.eq.s32.totalorder %s24, 0
      %p108 = por %p106, %p107
      %p109 = scmp.ne.s32.totalorder %s97, %s98
      %p110 = scmp.eq.s32.totalorder %s25, 1
      %p111 = por %p109, %p110
      %p113 = scmp.ne.s32.totalorder %s98, %s112
      %p114 = scmp.eq.s32.totalorder %s25, 0
      %p115 = por %p113, %p114
      %s117 = sadd.s32 %s116, 1
      %p120 = scmp.eq.s32.totalorder %s19, 1
      %p121 = scmp.ne.s32.totalorder %s116, %s118
      %p122 = scmp.eq.s32.totalorder %s19, 0
      %p123 = por %p121, %p122
      %p124 = scmp.ne.s32.totalorder %s116, %s118
      %p125 = scmp.eq.s32.totalorder %s24, 1
      %p126 = por %p124, %p125
      %p127 = scmp.ne.s32.totalorder %s118, %s119
      %p128 = scmp.eq.s32.totalorder %s24, 0
      %p129 = por %p127, %p128
      %p130 = scmp.ne.s32.totalorder %s118, %s119
      %p131 = scmp.eq.s32.totalorder %s25, 1
      %p132 = por %p130, %p131
      %p134 = scmp.ne.s32.totalorder %s119, %s133
      %p135 = scmp.eq.s32.totalorder %s25, 0
      %p136 = por %p134, %p135
      %s138 = sadd.s32 %s137, 1
      %p141 = scmp.eq.s32.totalorder %s19, 1
      %p142 = scmp.ne.s32.totalorder %s137, %s139
      %p143 = scmp.eq.s32.totalorder %s19, 0
      %p144 = por %p142, %p143
      %p145 = scmp.ne.s32.totalorder %s137, %s139
      %p146 = scmp.eq.s32.totalorder %s24, 1
      %p147 = por %p145, %p146
      %p148 = scmp.ne.s32.totalorder %s139, %s140
      %p149 = scmp.eq.s32.totalorder %s24, 0
      %p150 = por %p148, %p149
      %p151 = scmp.ne.s32.totalorder %s139, %s140
      %p152 = scmp.eq.s32.totalorder %s25, 1
      %p153 = por %p151, %p152
      %p155 = scmp.ne.s32.totalorder %s140, %s154
      %p156 = scmp.eq.s32.totalorder %s25, 0
      %p157 = por %p155, %p156
      %s159 = sadd.s32 %s158, 1
      %p162 = scmp.eq.s32.totalorder %s19, 1
      %p163 = scmp.ne.s32.totalorder %s158, %s160
      %p164 = scmp.eq.s32.totalorder %s19, 0
      %p165 = por %p163, %p164
      %p166 = scmp.ne.s32.totalorder %s158, %s160
      %p167 = scmp.eq.s32.totalorder %s24, 1
      %p168 = por %p166, %p167
      %p169 = scmp.ne.s32.totalorder %s160, %s161
      %p170 = scmp.eq.s32.totalorder %s24, 0
      %p171 = por %p169, %p170
      %p172 = scmp.ne.s32.totalorder %s160, %s161
      %p173 = scmp.eq.s32.totalorder %s25, 1
      %p174 = por %p172, %p173
      %p176 = scmp.ne.s32.totalorder %s161, %s175
      %p177 = scmp.eq.s32.totalorder %s25, 0
      %p178 = por %p176, %p177
      %s180 = sadd.s32 %s179, 1
      %p183 = scmp.eq.s32.totalorder %s19, 1
      %p184 = scmp.ne.s32.totalorder %s179, %s181
      %p185 = scmp.eq.s32.totalorder %s19, 0
      %p186 = por %p184, %p185
      %p187 = scmp.ne.s32.totalorder %s179, %s181
      %p188 = scmp.eq.s32.totalorder %s24, 1
      %p189 = por %p187, %p188
      %p190 = scmp.ne.s32.totalorder %s181, %s182
      %p191 = scmp.eq.s32.totalorder %s24, 0
      %p192 = por %p190, %p191
      %p193 = scmp.ne.s32.totalorder %s181, %s182
      %p194 = scmp.eq.s32.totalorder %s25, 1
      %p195 = por %p193, %p194
      %p197 = scmp.ne.s32.totalorder %s182, %s196
      %p198 = scmp.eq.s32.totalorder %s25, 0
      %p199 = por %p197, %p198
      %s201 = sadd.s32 %s200, 1
      %p204 = scmp.eq.s32.totalorder %s19, 1
      %p205 = scmp.ne.s32.totalorder %s200, %s202
      %p206 = scmp.eq.s32.totalorder %s19, 0
      %p207 = por %p205, %p206
      %p208 = scmp.ne.s32.totalorder %s200, %s202
      %p209 = scmp.eq.s32.totalorder %s24, 1
      %p210 = por %p208, %p209
      %p211 = scmp.ne.s32.totalorder %s202, %s203
      %p212 = scmp.eq.s32.totalorder %s24, 0
      %p213 = por %p211, %p212
      %p214 = scmp.ne.s32.totalorder %s202, %s203
      %p215 = scmp.eq.s32.totalorder %s25, 1
      %p216 = por %p214, %p215
      %p218 = scmp.ne.s32.totalorder %s203, %s217
      %p219 = scmp.eq.s32.totalorder %s25, 0
      %p220 = por %p218, %p219
      %s221 = ssub.s32 %s26, %s38
      %s222 = ssub.s32 %s27, %s34
      %s223 = sor.u32 %s221, %s222
      %p224 = scmp.eq.s32.totalorder %s223, 0
      %s226 = sadd.s32 %s225, 1
      %s227 = scalar_select %p224, %s225, %s226
      %p230 = pneg %p224
      %p231 = scmp.eq.s32.totalorder %s19, 1
      %p232 = por %p230, %p231
      %p233 = scmp.ne.s32.totalorder %s225, %s228
      %p234 = scmp.eq.s32.totalorder %s19, 0
      %p235 = por %p233, %p234
      %p236 = scmp.ne.s32.totalorder %s225, %s228
      %p237 = scmp.eq.s32.totalorder %s24, 1
      %p238 = por %p236, %p237
      %p239 = scmp.ne.s32.totalorder %s228, %s229
      %p240 = scmp.eq.s32.totalorder %s24, 0
      %p241 = por %p239, %p240
      %p242 = scmp.ne.s32.totalorder %s228, %s229
      %p243 = scmp.eq.s32.totalorder %s25, 1
      %p244 = por %p242, %p243
      %p246 = scmp.ne.s32.totalorder %s229, %s245
      %p247 = scmp.eq.s32.totalorder %s25, 0
      %p248 = por %p246, %p247
      %s249 = ssub.s32 %s26, %s38
      %p250 = scmp.eq.s32.totalorder %s249, 0
      %s252 = sadd.s32 %s251, 1
      %s253 = scalar_select %p250, %s251, %s252
      %p256 = pneg %p250
      %p257 = scmp.eq.s32.totalorder %s19, 1
      %p258 = por %p256, %p257
      %p259 = scmp.ne.s32.totalorder %s251, %s254
      %p260 = scmp.eq.s32.totalorder %s19, 0
      %p261 = por %p259, %p260
      %p262 = scmp.ne.s32.totalorder %s251, %s254
      %p263 = scmp.eq.s32.totalorder %s24, 1
      %p264 = por %p262, %p263
      %p265 = scmp.ne.s32.totalorder %s254, %s255
      %p266 = scmp.eq.s32.totalorder %s24, 0
      %p267 = por %p265, %p266
      %p268 = scmp.ne.s32.totalorder %s254, %s255
      %p269 = scmp.eq.s32.totalorder %s25, 1
      %p270 = por %p268, %p269
      %p272 = scmp.ne.s32.totalorder %s255, %s271
      %p273 = scmp.eq.s32.totalorder %s25, 0
      %p274 = por %p272, %p273
      %p275 = scmp.le.s32.totalorder 1, %s19
      %p276 = scmp.lt.s32.totalorder %s19, 3
      %p277 = pnand %p275, %p276
      %p278 = pneg %p277
      // Predicated region
      $region9: #{tpu_custom_call.1} parent=5 // pred_check
        _
      $region10: #{tpu_custom_call.1} parent=5 // pred_check_branch
        %280 = sbr.rel (%p277) target = $region12
      $region11: #{tpu_custom_call.1} parent=5 // pred_region
        %s281 = ssub.s32 %s19, 1
        // Predicated region
        $region13: #{tpu_custom_call.1} parent=11 // pred_check
          %p282 = pneg %p108
        $region14: #{tpu_custom_call.1} parent=11 // pred_check_branch
          %284 = sbr.rel (%p282) target = $region16
        $region15: #{tpu_custom_call.1} parent=11 // pred_region
          _
        $region16: #{tpu_custom_call.1} parent=11 // pred_fallthru
          _
        // Predicated region
        $region17: #{tpu_custom_call.1} parent=11 // pred_check
          %p285 = pneg %p129
        $region18: #{tpu_custom_call.1} parent=11 // pred_check_branch
          %287 = sbr.rel (%p285) target = $region20
        $region19: #{tpu_custom_call.1} parent=11 // pred_region
          _
        $region20: #{tpu_custom_call.1} parent=11 // pred_fallthru
          _
        // Predicated region
        $region21: #{tpu_custom_call.1} parent=11 // pred_check
          %p288 = pneg %p150
        $region22: #{tpu_custom_call.1} parent=11 // pred_check_branch
          %290 = sbr.rel (%p288) target = $region24
        $region23: #{tpu_custom_call.1} parent=11 // pred_region
          _
        $region24: #{tpu_custom_call.1} parent=11 // pred_fallthru
          _
        // Predicated region
        $region25: #{tpu_custom_call.1} parent=11 // pred_check
          %p291 = pneg %p171
        $region26: #{tpu_custom_call.1} parent=11 // pred_check_branch
          %293 = sbr.rel (%p291) target = $region28
        $region27: #{tpu_custom_call.1} parent=11 // pred_region
          _
        $region28: #{tpu_custom_call.1} parent=11 // pred_fallthru
          _
        // Predicated region
        $region29: #{tpu_custom_call.1} parent=11 // pred_check
          %p294 = pneg %p192
        $region30: #{tpu_custom_call.1} parent=11 // pred_check_branch
          %296 = sbr.rel (%p294) target = $region32
        $region31: #{tpu_custom_call.1} parent=11 // pred_region
          _
        $region32: #{tpu_custom_call.1} parent=11 // pred_fallthru
          _
        // Predicated region
        $region33: #{tpu_custom_call.1} parent=11 // pred_check
          %p297 = pneg %p213
        $region34: #{tpu_custom_call.1} parent=11 // pred_check_branch
          %299 = sbr.rel (%p297) target = $region36
        $region35: #{tpu_custom_call.1} parent=11 // pred_region
          _
        $region36: #{tpu_custom_call.1} parent=11 // pred_fallthru
          _
      $region12: #{tpu_custom_call.1} parent=5 // pred_fallthru
        _
      %p300 = scmp.lt.s32.totalorder %s19, 2
      // Predicated region
      $region37: #{tpu_custom_call.1} parent=5 // pred_check
        %p301 = pneg %p300
      $region38: #{tpu_custom_call.1} parent=5 // pred_check_branch
        %303 = sbr.rel (%p301) target = $region40
      $region39: #{tpu_custom_call.1} parent=5 // pred_region
        // Predicated region
        $region41: #{tpu_custom_call.1} parent=39 // pred_check
          %p304 = pneg %p53
        $region42: #{tpu_custom_call.1} parent=39 // pred_check_branch
          %306 = sbr.rel (%p304) target = $region44
        $region43: #{tpu_custom_call.1} parent=39 // pred_region
          %s307 = smul.u32 8, %s27
          %p308 = scmp.lt.s32.totalorder %s26, 1
          %s309 = scalar_select %p308, %s26, 1
          %p310 = scmp.lt.s32.totalorder %s307, 7
          %s311 = scalar_select %p310, %s307, 7
          %s312 = smul.addr %s309, 8
          %s313 = sadd.s32 %s311, %s312
          %s314 = smul.addr %s313, 8
          %s315 = scalar_lea.vmem %s0, %s314
          %s316 = smul.u32 8, %s27
        $region44: #{tpu_custom_call.1} parent=39 // pred_fallthru
          _
        // Predicated region
        $region45: #{tpu_custom_call.1} parent=39 // pred_check
          %p317 = pneg %p81
        $region46: #{tpu_custom_call.1} parent=39 // pred_check_branch
          %319 = sbr.rel (%p317) target = $region48
        $region47: #{tpu_custom_call.1} parent=39 // pred_region
          %s320 = smul.u32 8, %s27
          %p321 = scmp.lt.s32.totalorder %s26, 1
          %s322 = scalar_select %p321, %s26, 1
          %p323 = scmp.lt.s32.totalorder %s320, 7
          %s324 = scalar_select %p323, %s320, 7
          %s325 = smul.addr %s322, 8
          %s326 = sadd.s32 %s324, %s325
          %s327 = smul.addr %s326, 8
          %s328 = scalar_lea.vmem %s1, %s327
          %s329 = smul.u32 8, %s27
        $region48: #{tpu_custom_call.1} parent=39 // pred_fallthru
          _
      $region40: #{tpu_custom_call.1} parent=5 // pred_fallthru
        _
      %p330 = scmp.le.s32.totalorder 1, %s19
      %p331 = scmp.lt.s32.totalorder %s19, 3
      %p332 = pnand %p330, %p331
      %p333 = pneg %p332
      // Predicated region
      $region49: #{tpu_custom_call.1} parent=5 // pred_check
        _
      $region50: #{tpu_custom_call.1} parent=5 // pred_check_branch
        %335 = sbr.rel (%p332) target = $region52
      $region51: #{tpu_custom_call.1} parent=5 // pred_region
        %s336 = ssub.s32 %s19, 1
        %s337 = smul.u32 8, %s29
        %p338 = scmp.lt.s32.totalorder %s28, 1
        %s339 = scalar_select %p338, %s28, 1
        %p340 = scmp.lt.s32.totalorder %s337, 7
        %s341 = scalar_select %p340, %s337, 7
        %s342 = smul.addr %s339, 8
        %s343 = sadd.s32 %s341, %s342
        %s344 = smul.addr %s343, 8
        %s345 = scalar_lea.vmem %s0, %s344
        %p346 = pneg %p59
        %p347 = pneg %p56
        %s348 = smul.u32 8, %s29
        %p349 = scmp.lt.s32.totalorder %s28, 1
        %s350 = scalar_select %p349, %s28, 1
        %p351 = scmp.lt.s32.totalorder %s348, 7
        %s352 = scalar_select %p351, %s348, 7
        %s353 = smul.addr %s350, 8
        %s354 = sadd.s32 %s352, %s353
        %s355 = smul.addr %s354, 8
        %s356 = scalar_lea.vmem %s1, %s355
        %p357 = pneg %p87
        %p358 = pneg %p84
        %p359 = pneg %p108
        %p360 = pneg %p105
        %p361 = pneg %p129
        %p362 = pneg %p126
        %p363 = pneg %p150
        %p364 = pneg %p147
        %p365 = pneg %p171
        %p366 = pneg %p168
        %p367 = pneg %p192
        %p368 = pneg %p189
        %p369 = pneg %p213
        %p370 = pneg %p210
        %p371 = pneg %p241
        %p372 = pneg %p238
        %s373 = smul.u32 8, %s29
        %p374 = scmp.lt.s32.totalorder %s28, 1
        %s375 = scalar_select %p374, %s28, 1
        %p376 = scmp.lt.s32.totalorder %s373, 7
        %s377 = scalar_select %p376, %s373, 7
        %s378 = smul.addr %s375, 8
        %s379 = sadd.s32 %s377, %s378
        %s380 = smul.addr %s379, 8
        %s381 = scalar_lea.vmem %s8, %s380
        %p382 = pneg %p267
        %p383 = pneg %p264
        %s384 = sand.u32 %s254, 1
        %s385 = scalar_lea.sflag [#allocation3], %s384
        %s386 = sand.u32 %s254, 1
        %s387 = scalar_lea.vmem [#allocation2], %s386
        %s388 = smul.u32 8, %s29
        %p389 = scmp.lt.s32.totalorder %s28, 1
        %s390 = scalar_select %p389, %s28, 1
        %p391 = scmp.lt.s32.totalorder %s388, 7
        %s392 = scalar_select %p391, %s388, 7
        %s393 = smul.addr %s390, 8
        %s394 = sadd.s32 %s392, %s393
        %s395 = smul.addr %s394, 8
        %s396 = scalar_lea.vmem %s0, %s395
        %s397 = smul.u32 8, %s29
        %s398 = smul.u32 8, %s29
        %p399 = scmp.lt.s32.totalorder %s28, 1
        %s400 = scalar_select %p399, %s28, 1
        %p401 = scmp.lt.s32.totalorder %s398, 7
        %s402 = scalar_select %p401, %s398, 7
        %s403 = smul.addr %s400, 8
        %s404 = sadd.s32 %s402, %s403
        %s405 = smul.addr %s404, 8
        %s406 = scalar_lea.vmem %s1, %s405
        %s407 = smul.u32 8, %s29
        %s408 = smul.u32 8, %s29
        %p409 = scmp.lt.s32.totalorder %s28, 1
        %s410 = scalar_select %p409, %s28, 1
        %p411 = scmp.lt.s32.totalorder %s408, 7
        %s412 = scalar_select %p411, %s408, 7
        %s413 = smul.addr %s410, 8
        %s414 = sadd.s32 %s412, %s413
        %s415 = smul.addr %s414, 8
        %s416 = scalar_lea.vmem %s8, %s415
        %s417 = smul.u32 8, %s29
        %p419 = scmp.eq.s32.totalorder %s29, 0
        // Predicated region
        $region53: #{tpu_custom_call.1} parent=51 // pred_check
          %p420 = pneg %p419
        $region54: #{tpu_custom_call.1} parent=51 // pred_check_branch
          %422 = sbr.rel (%p420) target = $region56
        $region55: #{tpu_custom_call.1} parent=51 // pred_region
          %vm423 = vcmask 57344
          %424 = vst.msk [vmem:[%s387] sm:$0x1] %vm423, 0.0
        $region56: #{tpu_custom_call.1} parent=51 // pred_fallthru
          _
        %v425 = vld [vmem:[%s396] sm:$0xff]
        %v426 = vld [vmem:[%s396 + $0x8] sm:$0xff]
        %v427 = vld [vmem:[%s396 + $0x10] sm:$0xff]
        %v428 = vld [vmem:[%s396 + $0x18] sm:$0xff]
        %v429 = vld [vmem:[%s396 + $0x20] sm:$0xff]
        %v430 = vld [vmem:[%s396 + $0x28] sm:$0xff]
        %v431 = vld [vmem:[%s396 + $0x30] sm:$0xff]
        %v432 = vld [vmem:[%s396 + $0x38] sm:$0xff]
        %v433 = vld [vmem:[%s406] sm:$0xff]
        %v434 = vld [vmem:[%s406 + $0x8] sm:$0xff]
        %v435 = vld [vmem:[%s406 + $0x10] sm:$0xff]
        %v436 = vld [vmem:[%s406 + $0x18] sm:$0xff]
        %v437 = vld [vmem:[%s406 + $0x20] sm:$0xff]
        %v438 = vld [vmem:[%s406 + $0x28] sm:$0xff]
        %v439 = vld [vmem:[%s406 + $0x30] sm:$0xff]
        %v440 = vld [vmem:[%s406 + $0x38] sm:$0xff]
        %v441 = vpack.c.bf16 %v434, %v433
        %v442 = vpack.c.bf16 %v436, %v435
        %v443 = vpack.c.bf16 %v438, %v437
        %v444 = vpack.c.bf16 %v440, %v439
        %v445 = vld [vmem:[%s2] sm:$0x1]
        %v447 = vlaneseq
        %v448 = vshrl.u32 %v447, 7
        %v449 = vsub.s32 0, %v448
        %v450 = vrot.slane %v445, %v449
        %v452 = vadd.f32 %v425, %v450
        %v453 = vadd.f32 %v426, %v450
        %v454 = vadd.f32 %v427, %v450
        %v455 = vadd.f32 %v428, %v450
        %v456 = vadd.f32 %v429, %v450
        %v457 = vadd.f32 %v430, %v450
        %v458 = vadd.f32 %v431, %v450
        %v459 = vadd.f32 %v432, %v450
        %v460 = vld [vmem:[%s3] sm:$0x1]
        %v462 = vlaneseq
        %v463 = vshrl.u32 %v462, 7
        %v464 = vsub.s32 0, %v463
        %v465 = vrot.slane %v460, %v464
        %v467 = vmul.f32 %v452, %v465
        %v468 = vmul.f32 %v453, %v465
        %v469 = vmul.f32 %v454, %v465
        %v470 = vmul.f32 %v455, %v465
        %v471 = vmul.f32 %v456, %v465
        %v472 = vmul.f32 %v457, %v465
        %v473 = vmul.f32 %v458, %v465
        %v474 = vmul.f32 %v459, %v465
        %v475 = vpack.c.bf16 %v468, %v467
        %v476 = vpack.c.bf16 %v470, %v469
        %v477 = vpack.c.bf16 %v472, %v471
        %v478 = vpack.c.bf16 %v474, %v473
        %v479 = vld [vmem:[%s4] sm:$0xf]
        %v480 = vld [vmem:[%s4 + $0x4] sm:$0xf]
        %s481 = scalar_lea.vmem %s2, 1
        %v482 = vld [vmem:[%s481] sm:$0x1]
        %v484 = vlaneseq
        %v485 = vshrl.u32 %v484, 7
        %v486 = vsub.s32 0, %v485
        %v487 = vrot.slane %v482, %v486
        %v491 = vunpack.c.l.b16 %v479
        %v492 = vunpack.c.l.b16 %v480
        %v493 = vpack.c.b16 %v492, %v491
        %vm495 = vcmask 130048
        %v497 = vsel %vm495, %v475, 0
        %v500 = vsel %vm495, %v476, 0
        %v503 = vsel %vm495, %v477, 0
        %v506 = vsel %vm495, %v478, 0
        %508 = vmatprep.subr.bf16.mxu0 0
        %509 = vmatpush1.bf16.msra.mxu0 %v493
        %510 = vmatprep.subr.bf16.mxu0 0
        %511 = vmatpush1.bf16.msra.mxu0 0
        %512 = vmatprep.subr.bf16.mxu0 0
        %513 = vmatpush1.bf16.msra.mxu0 0
        %514 = vmatprep.subr.bf16.mxu0 0
        %515 = vmatpush1.bf16.msra.mxu0 0
        %516 = vmatprep.subr.bf16.mxu0 0
        %517 = vmatpush1.bf16.msra.mxu0 0
        %518 = vmatprep.subr.bf16.mxu0 0
        %519 = vmatpush1.bf16.msra.mxu0 0
        %520 = vmatprep.subr.bf16.mxu0 0
        %521 = vmatpush1.bf16.msra.mxu0 0
        %522 = vmatprep.subr.bf16.mxu0 0
        %523 = vmatpush1.bf16.msra.mxu0 0
        %524 = vmatprep.subr.bf16.mxu0 0
        %525 = vmatpush1.bf16.msra.mxu0 0
        %526 = vmatprep.subr.bf16.mxu0 0
        %527 = vmatpush1.bf16.msra.mxu0 0
        %528 = vmatprep.subr.bf16.mxu0 0
        %529 = vmatpush1.bf16.msra.mxu0 0
        %530 = vmatprep.subr.bf16.mxu0 0
        %531 = vmatpush1.bf16.msra.mxu0 0
        %532 = vmatprep.subr.bf16.mxu0 0
        %533 = vmatpush1.bf16.msra.mxu0 0
        %534 = vmatprep.subr.bf16.mxu0 0
        %535 = vmatpush1.bf16.msra.mxu0 0
        %536 = vmatprep.subr.bf16.mxu0 0
        %537 = vmatpush1.bf16.msra.mxu0 0
        %538 = vmatprep.subr.bf16.mxu0 0
        %539 = vmatpush1.bf16.msra.mxu0 0
        %540 = vmatprep.mubr.bf16.mxu0 0
        %541 = vmatmul.mubr.bf16.gmra.mrb[0].mxu0 %v497
        %v542 = vpop.f32.mrb[0].mxu0
        %v543 = vadd.f32 %v487, %v542
        %v544 = vpop.f32.mrb[0].mxu0
        %v545 = vpop.f32.mrb[0].mxu0
        %v546 = vadd.f32 %v487, %v545
        %v547 = vpop.f32.mrb[0].mxu0
        %548 = vmatprep.mubr.bf16.mxu0 0
        %549 = vmatmul.mubr.bf16.gmra.mrb[0].mxu0 %v500
        %v550 = vpop.f32.mrb[0].mxu0
        %v551 = vadd.f32 %v487, %v550
        %v552 = vpop.f32.mrb[0].mxu0
        %v553 = vpop.f32.mrb[0].mxu0
        %v554 = vadd.f32 %v487, %v553
        %v555 = vpop.f32.mrb[0].mxu0
        %556 = vmatprep.mubr.bf16.mxu0 0
        %557 = vmatmul.mubr.bf16.gmra.mrb[0].mxu0 %v503
        %v558 = vpop.f32.mrb[0].mxu0
        %v559 = vadd.f32 %v487, %v558
        %v560 = vpop.f32.mrb[0].mxu0
        %v561 = vpop.f32.mrb[0].mxu0
        %v562 = vadd.f32 %v487, %v561
        %v563 = vpop.f32.mrb[0].mxu0
        %564 = vmatprep.mubr.bf16.mxu0 0
        %565 = vmatmul.mubr.bf16.gmra.mrb[0].mxu0 %v506
        %v566 = vpop.f32.mrb[0].mxu0
        %v567 = vadd.f32 %v487, %v566
        %v568 = vpop.f32.mrb[0].mxu0
        %v569 = vpop.f32.mrb[0].mxu0
        %v570 = vadd.f32 %v487, %v569
        %v571 = vpop.f32.mrb[0].mxu0
        %572 = vdwg.mxu0
        %s573 = scalar_lea.vmem %s3, 1
        %v574 = vld [vmem:[%s573] sm:$0x1]
        %v576 = vlaneseq
        %v577 = vshrl.u32 %v576, 7
        %v578 = vsub.s32 0, %v577
        %v579 = vrot.slane %v574, %v578
        %v581 = vmul.f32 %v543, %v579
        %v582 = vmul.f32 %v546, %v579
        %v583 = vmul.f32 %v551, %v579
        %v584 = vmul.f32 %v554, %v579
        %v585 = vmul.f32 %v559, %v579
        %v586 = vmul.f32 %v562, %v579
        %v587 = vmul.f32 %v567, %v579
        %v588 = vmul.f32 %v570, %v579
        %v589 = vpack.c.bf16 %v582, %v581
        %v590 = vpack.c.bf16 %v584, %v583
        %v591 = vpack.c.bf16 %v586, %v585
        %v592 = vpack.c.bf16 %v588, %v587
        %s593 = scalar_lea.vmem %s4, 8
        %v594 = vld [vmem:[%s593] sm:$0xf]
        %v595 = vld [vmem:[%s593 + $0x4] sm:$0xf]
        %v598 = vunpack.c.l.b16 %v594
        %v599 = vunpack.c.l.b16 %v595
        %v600 = vpack.c.b16 %v599, %v598
        %v603 = vsel %vm495, %v589, 0
        %v606 = vsel %vm495, %v590, 0
        %v609 = vsel %vm495, %v591, 0
        %v612 = vsel %vm495, %v592, 0
        %614 = vmatprep.subr.bf16.mxu0 0
        %615 = vmatpush1.bf16.msra.mxu0 %v600
        %616 = vmatprep.subr.bf16.mxu0 0
        %617 = vmatpush1.bf16.msra.mxu0 0
        %618 = vmatprep.subr.bf16.mxu0 0
        %619 = vmatpush1.bf16.msra.mxu0 0
        %620 = vmatprep.subr.bf16.mxu0 0
        %621 = vmatpush1.bf16.msra.mxu0 0
        %622 = vmatprep.subr.bf16.mxu0 0
        %623 = vmatpush1.bf16.msra.mxu0 0
        %624 = vmatprep.subr.bf16.mxu0 0
        %625 = vmatpush1.bf16.msra.mxu0 0
        %626 = vmatprep.subr.bf16.mxu0 0
        %627 = vmatpush1.bf16.msra.mxu0 0
        %628 = vmatprep.subr.bf16.mxu0 0
        %629 = vmatpush1.bf16.msra.mxu0 0
        %630 = vmatprep.subr.bf16.mxu0 0
        %631 = vmatpush1.bf16.msra.mxu0 0
        %632 = vmatprep.subr.bf16.mxu0 0
        %633 = vmatpush1.bf16.msra.mxu0 0
        %634 = vmatprep.subr.bf16.mxu0 0
        %635 = vmatpush1.bf16.msra.mxu0 0
        %636 = vmatprep.subr.bf16.mxu0 0
        %637 = vmatpush1.bf16.msra.mxu0 0
        %638 = vmatprep.subr.bf16.mxu0 0
        %639 = vmatpush1.bf16.msra.mxu0 0
        %640 = vmatprep.subr.bf16.mxu0 0
        %641 = vmatpush1.bf16.msra.mxu0 0
        %642 = vmatprep.subr.bf16.mxu0 0
        %643 = vmatpush1.bf16.msra.mxu0 0
        %644 = vmatprep.subr.bf16.mxu0 0
        %645 = vmatpush1.bf16.msra.mxu0 0
        %646 = vmatprep.mubr.bf16.mxu0 0
        %647 = vmatmul.mubr.bf16.gmra.mrb[0].mxu0 %v603
        %v648 = vpop.f32.mrb[0].mxu0
        %v649 = vadd.f32 0.0, %v648
        %v650 = vpop.f32.mrb[0].mxu0
        %v651 = vpop.f32.mrb[0].mxu0
        %v652 = vadd.f32 0.0, %v651
        %v653 = vpop.f32.mrb[0].mxu0
        %654 = vmatprep.mubr.bf16.mxu0 0
        %655 = vmatmul.mubr.bf16.gmra.mrb[0].mxu0 %v606
        %v656 = vpop.f32.mrb[0].mxu0
        %v657 = vadd.f32 0.0, %v656
        %v658 = vpop.f32.mrb[0].mxu0
        %v659 = vpop.f32.mrb[0].mxu0
        %v660 = vadd.f32 0.0, %v659
        %v661 = vpop.f32.mrb[0].mxu0
        %662 = vmatprep.mubr.bf16.mxu0 0
        %663 = vmatmul.mubr.bf16.gmra.mrb[0].mxu0 %v609
        %v664 = vpop.f32.mrb[0].mxu0
        %v665 = vadd.f32 0.0, %v664
        %v666 = vpop.f32.mrb[0].mxu0
        %v667 = vpop.f32.mrb[0].mxu0
        %v668 = vadd.f32 0.0, %v667
        %v669 = vpop.f32.mrb[0].mxu0
        %670 = vmatprep.mubr.bf16.mxu0 0
        %671 = vmatmul.mubr.bf16.gmra.mrb[0].mxu0 %v612
        %v672 = vpop.f32.mrb[0].mxu0
        %v673 = vadd.f32 0.0, %v672
        %v674 = vpop.f32.mrb[0].mxu0
        %v675 = vpop.f32.mrb[0].mxu0
        %v676 = vadd.f32 0.0, %v675
        %v677 = vpop.f32.mrb[0].mxu0
        %678 = vdwg.mxu0
        %v679 = vpack.c.bf16 %v652, %v649
        %v680 = vpack.c.bf16 %v660, %v657
        %v681 = vpack.c.bf16 %v668, %v665
        %v682 = vpack.c.bf16 %v676, %v673
        %v683 = vld [vmem:[%s5] sm:$0xf]
        %v684 = vld [vmem:[%s6] sm:$0xf]
        %v685 = vld [vmem:[%s6 + $0x4] sm:$0xf]
        %v688 = vunpack.c.l.b16 %v684
        %v689 = vunpack.c.l.b16 %v685
        %v690 = vpack.c.b16 %v689, %v688
        %v693 = vsel %vm495, %v441, 0
        %v696 = vsel %vm495, %v442, 0
        %v699 = vsel %vm495, %v443, 0
        %v702 = vsel %vm495, %v444, 0
        %704 = vmatprep.subr.bf16.mxu0 0
        %705 = vmatpush1.bf16.msra.mxu0 %v690
        %706 = vmatprep.subr.bf16.mxu0 0
        %707 = vmatpush1.bf16.msra.mxu0 0
        %708 = vmatprep.subr.bf16.mxu0 0
        %709 = vmatpush1.bf16.msra.mxu0 0
        %710 = vmatprep.subr.bf16.mxu0 0
        %711 = vmatpush1.bf16.msra.mxu0 0
        %712 = vmatprep.subr.bf16.mxu0 0
        %713 = vmatpush1.bf16.msra.mxu0 0
        %714 = vmatprep.subr.bf16.mxu0 0
        %715 = vmatpush1.bf16.msra.mxu0 0
        %716 = vmatprep.subr.bf16.mxu0 0
        %717 = vmatpush1.bf16.msra.mxu0 0
        %718 = vmatprep.subr.bf16.mxu0 0
        %719 = vmatpush1.bf16.msra.mxu0 0
        %720 = vmatprep.subr.bf16.mxu0 0
        %721 = vmatpush1.bf16.msra.mxu0 0
        %722 = vmatprep.subr.bf16.mxu0 0
        %723 = vmatpush1.bf16.msra.mxu0 0
        %724 = vmatprep.subr.bf16.mxu0 0
        %725 = vmatpush1.bf16.msra.mxu0 0
        %726 = vmatprep.subr.bf16.mxu0 0
        %727 = vmatpush1.bf16.msra.mxu0 0
        %728 = vmatprep.subr.bf16.mxu0 0
        %729 = vmatpush1.bf16.msra.mxu0 0
        %730 = vmatprep.subr.bf16.mxu0 0
        %731 = vmatpush1.bf16.msra.mxu0 0
        %732 = vmatprep.subr.bf16.mxu0 0
        %733 = vmatpush1.bf16.msra.mxu0 0
        %734 = vmatprep.subr.bf16.mxu0 0
        %735 = vmatpush1.bf16.msra.mxu0 0
        %736 = vmatprep.mubr.bf16.mxu0 0
        %737 = vmatmul.mubr.bf16.gmra.mrb[0].mxu0 %v693
        %v738 = vpop.f32.mrb[0].mxu0
        %v739 = vadd.f32 0.0, %v738
        %v740 = vpop.f32.mrb[0].mxu0
        %v741 = vpop.f32.mrb[0].mxu0
        %v742 = vadd.f32 0.0, %v741
        %v743 = vpop.f32.mrb[0].mxu0
        %744 = vmatprep.mubr.bf16.mxu0 0
        %745 = vmatmul.mubr.bf16.gmra.mrb[0].mxu0 %v696
        %v746 = vpop.f32.mrb[0].mxu0
        %v747 = vadd.f32 0.0, %v746
        %v748 = vpop.f32.mrb[0].mxu0
        %v749 = vpop.f32.mrb[0].mxu0
        %v750 = vadd.f32 0.0, %v749
        %v751 = vpop.f32.mrb[0].mxu0
        %752 = vmatprep.mubr.bf16.mxu0 0
        %753 = vmatmul.mubr.bf16.gmra.mrb[0].mxu0 %v699
        %v754 = vpop.f32.mrb[0].mxu0
        %v755 = vadd.f32 0.0, %v754
        %v756 = vpop.f32.mrb[0].mxu0
        %v757 = vpop.f32.mrb[0].mxu0
        %v758 = vadd.f32 0.0, %v757
        %v759 = vpop.f32.mrb[0].mxu0
        %760 = vmatprep.mubr.bf16.mxu0 0
        %761 = vmatmul.mubr.bf16.gmra.mrb[0].mxu0 %v702
        %v762 = vpop.f32.mrb[0].mxu0
        %v763 = vadd.f32 0.0, %v762
        %v764 = vpop.f32.mrb[0].mxu0
        %v765 = vpop.f32.mrb[0].mxu0
        %v766 = vadd.f32 0.0, %v765
        %v767 = vpop.f32.mrb[0].mxu0
        %768 = vdwg.mxu0
        %vm769 = vcmask 64512
        %v771 = vsel %vm769, %v679, 0
        %v774 = vsel %vm769, %v680, 0
        %v777 = vsel %vm769, %v681, 0
        %v780 = vsel %vm769, %v682, 0
        %vm782 = vcmask 1043456
        %v784 = vsel %vm782, %v683, 0
        %786 = vmatprep.subr.bf16.mxu0 0
        %787 = vmatpush1.bf16.msra.mxu0 %v784
        %788 = vmatprep.subr.bf16.mxu0 0
        %789 = vmatpush1.bf16.msra.mxu0 0
        %790 = vmatprep.subr.bf16.mxu0 0
        %791 = vmatpush1.bf16.msra.mxu0 0
        %792 = vmatprep.subr.bf16.mxu0 0
        %793 = vmatpush1.bf16.msra.mxu0 0
        %794 = vmatprep.subr.bf16.mxu0 0
        %795 = vmatpush1.bf16.msra.mxu0 0
        %796 = vmatprep.subr.bf16.mxu0 0
        %797 = vmatpush1.bf16.msra.mxu0 0
        %798 = vmatprep.subr.bf16.mxu0 0
        %799 = vmatpush1.bf16.msra.mxu0 0
        %800 = vmatprep.subr.bf16.mxu0 0
        %801 = vmatpush1.bf16.msra.mxu0 0
        %802 = vmatprep.subr.bf16.mxu0 0
        %803 = vmatpush1.bf16.msra.mxu0 0
        %804 = vmatprep.subr.bf16.mxu0 0
        %805 = vmatpush1.bf16.msra.mxu0 0
        %806 = vmatprep.subr.bf16.mxu0 0
        %807 = vmatpush1.bf16.msra.mxu0 0
        %808 = vmatprep.subr.bf16.mxu0 0
        %809 = vmatpush1.bf16.msra.mxu0 0
        %810 = vmatprep.subr.bf16.mxu0 0
        %811 = vmatpush1.bf16.msra.mxu0 0
        %812 = vmatprep.subr.bf16.mxu0 0
        %813 = vmatpush1.bf16.msra.mxu0 0
        %814 = vmatprep.subr.bf16.mxu0 0
        %815 = vmatpush1.bf16.msra.mxu0 0
        %816 = vmatprep.subr.bf16.mxu0 0
        %817 = vmatpush1.bf16.msra.mxu0 0
        %818 = vmatprep.mubr.bf16.mxu0 0
        %819 = vmatmul.mubr.bf16.gmra.mrb[0].mxu0 %v771
        %v820 = vpop.f32.mrb[0].mxu0
        %v821 = vadd.f32 %v739, %v820
        %v822 = vpop.f32.mrb[0].mxu0
        %v823 = vpop.f32.mrb[0].mxu0
        %v824 = vadd.f32 %v742, %v823
        %v825 = vpop.f32.mrb[0].mxu0
        %826 = vmatprep.mubr.bf16.mxu0 0
        %827 = vmatmul.mubr.bf16.gmra.mrb[0].mxu0 %v774
        %v828 = vpop.f32.mrb[0].mxu0
        %v829 = vadd.f32 %v747, %v828
        %v830 = vpop.f32.mrb[0].mxu0
        %v831 = vpop.f32.mrb[0].mxu0
        %v832 = vadd.f32 %v750, %v831
        %v833 = vpop.f32.mrb[0].mxu0
        %834 = vmatprep.mubr.bf16.mxu0 0
        %835 = vmatmul.mubr.bf16.gmra.mrb[0].mxu0 %v777
        %v836 = vpop.f32.mrb[0].mxu0
        %v837 = vadd.f32 %v755, %v836
        %v838 = vpop.f32.mrb[0].mxu0
        %v839 = vpop.f32.mrb[0].mxu0
        %v840 = vadd.f32 %v758, %v839
        %v841 = vpop.f32.mrb[0].mxu0
        %842 = vmatprep.mubr.bf16.mxu0 0
        %843 = vmatmul.mubr.bf16.gmra.mrb[0].mxu0 %v780
        %v844 = vpop.f32.mrb[0].mxu0
        %v845 = vadd.f32 %v763, %v844
        %v846 = vpop.f32.mrb[0].mxu0
        %v847 = vpop.f32.mrb[0].mxu0
        %v848 = vadd.f32 %v766, %v847
        %v849 = vpop.f32.mrb[0].mxu0
        %850 = vdwg.mxu0
        %v851 = vld [vmem:[%s7] sm:$0x1]
        %v853 = vlaneseq
        %v854 = vshrl.u32 %v853, 7
        %v855 = vsub.s32 0, %v854
        %v856 = vrot.slane %v851, %v855
        %v858 = vadd.f32 %v821, %v856
        %v859 = vadd.f32 %v824, %v856
        %v860 = vadd.f32 %v829, %v856
        %v861 = vadd.f32 %v832, %v856
        %v862 = vadd.f32 %v837, %v856
        %v863 = vadd.f32 %v840, %v856
        %v864 = vadd.f32 %v845, %v856
        %v865 = vadd.f32 %v848, %v856
        %v866 = vadd.f32 %v858, 2.0
        %v867 = vadd.f32 %v859, 2.0
        %v868 = vadd.f32 %v860, 2.0
        %v869 = vadd.f32 %v861, 2.0
        %v870 = vadd.f32 %v862, 2.0
        %v871 = vadd.f32 %v863, 2.0
        %v872 = vadd.f32 %v864, 2.0
        %v873 = vadd.f32 %v865, 2.0
        %v874 = vxor.u32 %v866, 2147483648
        %v875 = vxor.u32 %v867, 2147483648
        %v876 = vxor.u32 %v868, 2147483648
        %v877 = vxor.u32 %v869, 2147483648
        %v878 = vxor.u32 %v870, 2147483648
        %v879 = vxor.u32 %v871, 2147483648
        %v880 = vxor.u32 %v872, 2147483648
        %v881 = vxor.u32 %v873, 2147483648
        %v882 = vmul.f32 %v874, 1.442695
        %v883 = vpow.pop %v882
        %v884 = vmul.f32 %v875, 1.442695
        %v885 = vpow.pop %v884
        %v886 = vmul.f32 %v876, 1.442695
        %v887 = vpow.pop %v886
        %v888 = vmul.f32 %v877, 1.442695
        %v889 = vpow.pop %v888
        %v890 = vmul.f32 %v878, 1.442695
        %v891 = vpow.pop %v890
        %v892 = vmul.f32 %v879, 1.442695
        %v893 = vpow.pop %v892
        %v894 = vmul.f32 %v880, 1.442695
        %v895 = vpow.pop %v894
        %v896 = vmul.f32 %v881, 1.442695
        %v897 = vpow.pop %v896
        %v898 = vadd.f32 %v883, 1.0
        %v899 = vadd.f32 %v885, 1.0
        %v900 = vadd.f32 %v887, 1.0
        %v901 = vadd.f32 %v889, 1.0
        %v902 = vadd.f32 %v891, 1.0
        %v903 = vadd.f32 %v893, 1.0
        %v904 = vadd.f32 %v895, 1.0
        %v905 = vadd.f32 %v897, 1.0
        %v906 = vrcp.pop %v898
        %v907 = vmul.f32 1.0, %v906
        %v908 = vrcp.pop %v899
        %v909 = vmul.f32 1.0, %v908
        %v910 = vrcp.pop %v900
        %v911 = vmul.f32 1.0, %v910
        %v912 = vrcp.pop %v901
        %v913 = vmul.f32 1.0, %v912
        %v914 = vrcp.pop %v902
        %v915 = vmul.f32 1.0, %v914
        %v916 = vrcp.pop %v903
        %v917 = vmul.f32 1.0, %v916
        %v918 = vrcp.pop %v904
        %v919 = vmul.f32 1.0, %v918
        %v920 = vrcp.pop %v905
        %v921 = vmul.f32 1.0, %v920
        %930 = vrot.lane.b32.xlu0 %v858, 8
        %v931 = vpop.permute.xlu0 %930
        %932 = vrot.lane.b32.xlu0 %v859, 8
        %v933 = vpop.permute.xlu0 %932
        %934 = vrot.lane.b32.xlu0 %v860, 8
        %v935 = vpop.permute.xlu0 %934
        %936 = vrot.lane.b32.xlu0 %v861, 8
        %v937 = vpop.permute.xlu0 %936
        %938 = vrot.lane.b32.xlu0 %v862, 8
        %v939 = vpop.permute.xlu0 %938
        %940 = vrot.lane.b32.xlu0 %v863, 8
        %v941 = vpop.permute.xlu0 %940
        %942 = vrot.lane.b32.xlu0 %v864, 8
        %v943 = vpop.permute.xlu0 %942
        %944 = vrot.lane.b32.xlu0 %v865, 8
        %v945 = vpop.permute.xlu0 %944
        %v954 = vadd.f32 %v649, %v931
        %v955 = vadd.f32 %v652, %v933
        %v956 = vadd.f32 %v657, %v935
        %v957 = vadd.f32 %v660, %v937
        %v958 = vadd.f32 %v665, %v939
        %v959 = vadd.f32 %v668, %v941
        %v960 = vadd.f32 %v673, %v943
        %v961 = vadd.f32 %v676, %v945
        %v962 = vmul.f32 %v954, %v907
        %v963 = vmul.f32 %v955, %v909
        %v964 = vmul.f32 %v956, %v911
        %v965 = vmul.f32 %v957, %v913
        %v966 = vmul.f32 %v958, %v915
        %v967 = vmul.f32 %v959, %v917
        %v968 = vmul.f32 %v960, %v919
        %v969 = vmul.f32 %v961, %v921
        %v970 = vsub.f32 0.0, %v866
        %v971 = vsub.f32 0.0, %v867
        %v972 = vsub.f32 0.0, %v868
        %v973 = vsub.f32 0.0, %v869
        %v974 = vsub.f32 0.0, %v870
        %v975 = vsub.f32 0.0, %v871
        %v976 = vsub.f32 0.0, %v872
        %v977 = vsub.f32 0.0, %v873
        %v978 = vmax.f32 %v970, 0.0
        %v979 = vmax.f32 %v971, 0.0
        %v980 = vmax.f32 %v972, 0.0
        %v981 = vmax.f32 %v973, 0.0
        %v982 = vmax.f32 %v974, 0.0
        %v983 = vmax.f32 %v975, 0.0
        %v984 = vmax.f32 %v976, 0.0
        %v985 = vmax.f32 %v977, 0.0
        %vm986 = vcmp.ne.f32.partialorder %v970, %v970
        %vm987 = vcmp.ne.f32.partialorder %v971, %v971
        %vm988 = vcmp.ne.f32.partialorder %v972, %v972
        %vm989 = vcmp.ne.f32.partialorder %v973, %v973
        %vm990 = vcmp.ne.f32.partialorder %v974, %v974
        %vm991 = vcmp.ne.f32.partialorder %v975, %v975
        %vm992 = vcmp.ne.f32.partialorder %v976, %v976
        %vm993 = vcmp.ne.f32.partialorder %v977, %v977
        %v994 = vadd.f32 %v970, 0.0
        %v995 = vadd.f32 %v971, 0.0
        %v996 = vadd.f32 %v972, 0.0
        %v997 = vadd.f32 %v973, 0.0
        %v998 = vadd.f32 %v974, 0.0
        %v999 = vadd.f32 %v975, 0.0
        %v1000 = vadd.f32 %v976, 0.0
        %v1001 = vadd.f32 %v977, 0.0
        %v1002 = vand.u32 2147483647, %v970
        %v1003 = vand.u32 2147483647, %v971
        %v1004 = vand.u32 2147483647, %v972
        %v1005 = vand.u32 2147483647, %v973
        %v1006 = vand.u32 2147483647, %v974
        %v1007 = vand.u32 2147483647, %v975
        %v1008 = vand.u32 2147483647, %v976
        %v1009 = vand.u32 2147483647, %v977
        %v1010 = vsub.f32 0.0, %v1002
        %v1011 = vsub.f32 0.0, %v1003
        %v1012 = vsub.f32 0.0, %v1004
        %v1013 = vsub.f32 0.0, %v1005
        %v1014 = vsub.f32 0.0, %v1006
        %v1015 = vsub.f32 0.0, %v1007
        %v1016 = vsub.f32 0.0, %v1008
        %v1017 = vsub.f32 0.0, %v1009
        %v1018 = vmul.f32 %v1010, 1.442695
        %v1019 = vpow.pop %v1018
        %v1020 = vmul.f32 %v1011, 1.442695
        %v1021 = vpow.pop %v1020
        %v1022 = vmul.f32 %v1012, 1.442695
        %v1023 = vpow.pop %v1022
        %v1024 = vmul.f32 %v1013, 1.442695
        %v1025 = vpow.pop %v1024
        %v1026 = vmul.f32 %v1014, 1.442695
        %v1027 = vpow.pop %v1026
        %v1028 = vmul.f32 %v1015, 1.442695
        %v1029 = vpow.pop %v1028
        %v1030 = vmul.f32 %v1016, 1.442695
        %v1031 = vpow.pop %v1030
        %v1032 = vmul.f32 %v1017, 1.442695
        %v1033 = vpow.pop %v1032
        %v1034 = vadd.f32 %v1019, 1.0
        %v1035 = vlog2.pop %v1034
        %v1036 = vmul.f32 %v1035, 0.6931472
        %v1037 = vmul.f32 -0.5, %v1019
        %v1038 = vadd.f32 %v1037, 1.0
        %v1039 = vmul.f32 %v1038, %v1019
        %v1040 = vand.u32 2147483647, %v1019
        %vm1041 = vcmp.lt.f32.partialorder %v1040, 0.0004427343
        %v1042 = vsel %vm1041, %v1039, %v1036
        %v1043 = vadd.f32 %v1021, 1.0
        %v1044 = vlog2.pop %v1043
        %v1045 = vmul.f32 %v1044, 0.6931472
        %v1046 = vmul.f32 -0.5, %v1021
        %v1047 = vadd.f32 %v1046, 1.0
        %v1048 = vmul.f32 %v1047, %v1021
        %v1049 = vand.u32 2147483647, %v1021
        %vm1050 = vcmp.lt.f32.partialorder %v1049, 0.0004427343
        %v1051 = vsel %vm1050, %v1048, %v1045
        %v1052 = vadd.f32 %v1023, 1.0
        %v1053 = vlog2.pop %v1052
        %v1054 = vmul.f32 %v1053, 0.6931472
        %v1055 = vmul.f32 -0.5, %v1023
        %v1056 = vadd.f32 %v1055, 1.0
        %v1057 = vmul.f32 %v1056, %v1023
        %v1058 = vand.u32 2147483647, %v1023
        %vm1059 = vcmp.lt.f32.partialorder %v1058, 0.0004427343
        %v1060 = vsel %vm1059, %v1057, %v1054
        %v1061 = vadd.f32 %v1025, 1.0
        %v1062 = vlog2.pop %v1061
        %v1063 = vmul.f32 %v1062, 0.6931472
        %v1064 = vmul.f32 -0.5, %v1025
        %v1065 = vadd.f32 %v1064, 1.0
        %v1066 = vmul.f32 %v1065, %v1025
        %v1067 = vand.u32 2147483647, %v1025
        %vm1068 = vcmp.lt.f32.partialorder %v1067, 0.0004427343
        %v1069 = vsel %vm1068, %v1066, %v1063
        %v1070 = vadd.f32 %v1027, 1.0
        %v1071 = vlog2.pop %v1070
        %v1072 = vmul.f32 %v1071, 0.6931472
        %v1073 = vmul.f32 -0.5, %v1027
        %v1074 = vadd.f32 %v1073, 1.0
        %v1075 = vmul.f32 %v1074, %v1027
        %v1076 = vand.u32 2147483647, %v1027
        %vm1077 = vcmp.lt.f32.partialorder %v1076, 0.0004427343
        %v1078 = vsel %vm1077, %v1075, %v1072
        %v1079 = vadd.f32 %v1029, 1.0
        %v1080 = vlog2.pop %v1079
        %v1081 = vmul.f32 %v1080, 0.6931472
        %v1082 = vmul.f32 -0.5, %v1029
        %v1083 = vadd.f32 %v1082, 1.0
        %v1084 = vmul.f32 %v1083, %v1029
        %v1085 = vand.u32 2147483647, %v1029
        %vm1086 = vcmp.lt.f32.partialorder %v1085, 0.0004427343
        %v1087 = vsel %vm1086, %v1084, %v1081
        %v1088 = vadd.f32 %v1031, 1.0
        %v1089 = vlog2.pop %v1088
        %v1090 = vmul.f32 %v1089, 0.6931472
        %v1091 = vmul.f32 -0.5, %v1031
        %v1092 = vadd.f32 %v1091, 1.0
        %v1093 = vmul.f32 %v1092, %v1031
        %v1094 = vand.u32 2147483647, %v1031
        %vm1095 = vcmp.lt.f32.partialorder %v1094, 0.0004427343
        %v1096 = vsel %vm1095, %v1093, %v1090
        %v1097 = vadd.f32 %v1033, 1.0
        %v1098 = vlog2.pop %v1097
        %v1099 = vmul.f32 %v1098, 0.6931472
        %v1100 = vmul.f32 -0.5, %v1033
        %v1101 = vadd.f32 %v1100, 1.0
        %v1102 = vmul.f32 %v1101, %v1033
        %v1103 = vand.u32 2147483647, %v1033
        %vm1104 = vcmp.lt.f32.partialorder %v1103, 0.0004427343
        %v1105 = vsel %vm1104, %v1102, %v1099
        %v1106 = vadd.f32 %v978, %v1042
        %v1107 = vadd.f32 %v979, %v1051
        %v1108 = vadd.f32 %v980, %v1060
        %v1109 = vadd.f32 %v981, %v1069
        %v1110 = vadd.f32 %v982, %v1078
        %v1111 = vadd.f32 %v983, %v1087
        %v1112 = vadd.f32 %v984, %v1096
        %v1113 = vadd.f32 %v985, %v1105
        %v1114 = vsel %vm986, %v994, %v1106
        %v1115 = vsel %vm987, %v995, %v1107
        %v1116 = vsel %vm988, %v996, %v1108
        %v1117 = vsel %vm989, %v997, %v1109
        %v1118 = vsel %vm990, %v998, %v1110
        %v1119 = vsel %vm991, %v999, %v1111
        %v1120 = vsel %vm992, %v1000, %v1112
        %v1121 = vsel %vm993, %v1001, %v1113
        %v1122 = vsub.f32 0.0, %v1114
        %v1123 = vsub.f32 0.0, %v1115
        %v1124 = vsub.f32 0.0, %v1116
        %v1125 = vsub.f32 0.0, %v1117
        %v1126 = vsub.f32 0.0, %v1118
        %v1127 = vsub.f32 0.0, %v1119
        %v1128 = vsub.f32 0.0, %v1120
        %v1129 = vsub.f32 0.0, %v1121
        %vm1130 = vcmask 130112
        %v1131 = vsel %vm1130, %v1122, 0.0
        %v1132 = vsel %vm1130, %v1123, 0.0
        %v1133 = vadd.f32 %v1131, %v1132
        %v1134 = vsel %vm1130, %v1124, 0.0
        %v1135 = vadd.f32 %v1133, %v1134
        %v1136 = vsel %vm1130, %v1125, 0.0
        %v1137 = vadd.f32 %v1135, %v1136
        %v1138 = vsel %vm1130, %v1126, 0.0
        %v1139 = vadd.f32 %v1137, %v1138
        %v1140 = vsel %vm1130, %v1127, 0.0
        %v1141 = vadd.f32 %v1139, %v1140
        %v1142 = vsel %vm1130, %v1128, 0.0
        %v1143 = vadd.f32 %v1141, %v1142
        %v1144 = vsel %vm1130, %v1129, 0.0
        %v1145 = vadd.f32 %v1143, %v1144
        %v1146 = vrot.slane %v1145, 4
        %v1147 = vadd.f32 %v1145, %v1146
        %v1148 = vrot.slane %v1147, 2
        %v1149 = vadd.f32 %v1147, %v1148
        %v1150 = vrot.slane %v1149, 1
        %v1151 = vadd.f32 %v1149, %v1150
        %v1152 = vadd.f32 %v1151, 0.0
        %v1153 = vsel %vm769, %v649, %v962
        %v1154 = vsel %vm769, %v652, %v963
        %v1155 = vsel %vm769, %v657, %v964
        %v1156 = vsel %vm769, %v660, %v965
        %v1157 = vsel %vm769, %v665, %v966
        %v1158 = vsel %vm769, %v668, %v967
        %v1159 = vsel %vm769, %v673, %v968
        %v1160 = vsel %vm769, %v676, %v969
        %s1161 = scalar_lea.vmem %s2, 2
        %v1162 = vld [vmem:[%s1161] sm:$0x1]
        %v1164 = vlaneseq
        %v1165 = vshrl.u32 %v1164, 7
        %v1166 = vsub.s32 0, %v1165
        %v1167 = vrot.slane %v1162, %v1166
        %v1169 = vadd.f32 %v1153, %v1167
        %v1170 = vadd.f32 %v1154, %v1167
        %v1171 = vadd.f32 %v1155, %v1167
        %v1172 = vadd.f32 %v1156, %v1167
        %v1173 = vadd.f32 %v1157, %v1167
        %v1174 = vadd.f32 %v1158, %v1167
        %v1175 = vadd.f32 %v1159, %v1167
        %v1176 = vadd.f32 %v1160, %v1167
        %s1177 = scalar_lea.vmem %s3, 2
        %v1178 = vld [vmem:[%s1177] sm:$0x1]
        %v1180 = vlaneseq
        %v1181 = vshrl.u32 %v1180, 7
        %v1182 = vsub.s32 0, %v1181
        %v1183 = vrot.slane %v1178, %v1182
        %v1185 = vmul.f32 %v1169, %v1183
        %v1186 = vmul.f32 %v1170, %v1183
        %v1187 = vmul.f32 %v1171, %v1183
        %v1188 = vmul.f32 %v1172, %v1183
        %v1189 = vmul.f32 %v1173, %v1183
        %v1190 = vmul.f32 %v1174, %v1183
        %v1191 = vmul.f32 %v1175, %v1183
        %v1192 = vmul.f32 %v1176, %v1183
        %v1193 = vpack.c.bf16 %v1186, %v1185
        %v1194 = vpack.c.bf16 %v1188, %v1187
        %v1195 = vpack.c.bf16 %v1190, %v1189
        %v1196 = vpack.c.bf16 %v1192, %v1191
        %s1197 = scalar_lea.vmem %s4, 16
        %v1198 = vld [vmem:[%s1197] sm:$0xf]
        %v1199 = vld [vmem:[%s1197 + $0x4] sm:$0xf]
        %v1202 = vunpack.c.l.b16 %v1198
        %v1203 = vunpack.c.l.b16 %v1199
        %v1204 = vpack.c.b16 %v1203, %v1202
        %v1207 = vsel %vm495, %v1193, 0
        %v1210 = vsel %vm495, %v1194, 0
        %v1213 = vsel %vm495, %v1195, 0
        %v1216 = vsel %vm495, %v1196, 0
        %1218 = vmatprep.subr.bf16.mxu0 0
        %1219 = vmatpush1.bf16.msra.mxu0 %v1204
        %1220 = vmatprep.subr.bf16.mxu0 0
        %1221 = vmatpush1.bf16.msra.mxu0 0
        %1222 = vmatprep.subr.bf16.mxu0 0
        %1223 = vmatpush1.bf16.msra.mxu0 0
        %1224 = vmatprep.subr.bf16.mxu0 0
        %1225 = vmatpush1.bf16.msra.mxu0 0
        %1226 = vmatprep.subr.bf16.mxu0 0
        %1227 = vmatpush1.bf16.msra.mxu0 0
        %1228 = vmatprep.subr.bf16.mxu0 0
        %1229 = vmatpush1.bf16.msra.mxu0 0
        %1230 = vmatprep.subr.bf16.mxu0 0
        %1231 = vmatpush1.bf16.msra.mxu0 0
        %1232 = vmatprep.subr.bf16.mxu0 0
        %1233 = vmatpush1.bf16.msra.mxu0 0
        %1234 = vmatprep.subr.bf16.mxu0 0
        %1235 = vmatpush1.bf16.msra.mxu0 0
        %1236 = vmatprep.subr.bf16.mxu0 0
        %1237 = vmatpush1.bf16.msra.mxu0 0
        %1238 = vmatprep.subr.bf16.mxu0 0
        %1239 = vmatpush1.bf16.msra.mxu0 0
        %1240 = vmatprep.subr.bf16.mxu0 0
        %1241 = vmatpush1.bf16.msra.mxu0 0
        %1242 = vmatprep.subr.bf16.mxu0 0
        %1243 = vmatpush1.bf16.msra.mxu0 0
        %1244 = vmatprep.subr.bf16.mxu0 0
        %1245 = vmatpush1.bf16.msra.mxu0 0
        %1246 = vmatprep.subr.bf16.mxu0 0
        %1247 = vmatpush1.bf16.msra.mxu0 0
        %1248 = vmatprep.subr.bf16.mxu0 0
        %1249 = vmatpush1.bf16.msra.mxu0 0
        %1250 = vmatprep.mubr.bf16.mxu0 0
        %1251 = vmatmul.mubr.bf16.gmra.mrb[0].mxu0 %v1207
        %v1252 = vpop.f32.mrb[0].mxu0
        %v1253 = vadd.f32 0.0, %v1252
        %v1254 = vpop.f32.mrb[0].mxu0
        %v1255 = vpop.f32.mrb[0].mxu0
        %v1256 = vadd.f32 0.0, %v1255
        %v1257 = vpop.f32.mrb[0].mxu0
        %1258 = vmatprep.mubr.bf16.mxu0 0
        %1259 = vmatmul.mubr.bf16.gmra.mrb[0].mxu0 %v1210
        %v1260 = vpop.f32.mrb[0].mxu0
        %v1261 = vadd.f32 0.0, %v1260
        %v1262 = vpop.f32.mrb[0].mxu0
        %v1263 = vpop.f32.mrb[0].mxu0
        %v1264 = vadd.f32 0.0, %v1263
        %v1265 = vpop.f32.mrb[0].mxu0
        %1266 = vmatprep.mubr.bf16.mxu0 0
        %1267 = vmatmul.mubr.bf16.gmra.mrb[0].mxu0 %v1213
        %v1268 = vpop.f32.mrb[0].mxu0
        %v1269 = vadd.f32 0.0, %v1268
        %v1270 = vpop.f32.mrb[0].mxu0
        %v1271 = vpop.f32.mrb[0].mxu0
        %v1272 = vadd.f32 0.0, %v1271
        %v1273 = vpop.f32.mrb[0].mxu0
        %1274 = vmatprep.mubr.bf16.mxu0 0
        %1275 = vmatmul.mubr.bf16.gmra.mrb[0].mxu0 %v1216
        %v1276 = vpop.f32.mrb[0].mxu0
        %v1277 = vadd.f32 0.0, %v1276
        %v1278 = vpop.f32.mrb[0].mxu0
        %v1279 = vpop.f32.mrb[0].mxu0
        %v1280 = vadd.f32 0.0, %v1279
        %v1281 = vpop.f32.mrb[0].mxu0
        %1282 = vdwg.mxu0
        %v1283 = vpack.c.bf16 %v1256, %v1253
        %v1284 = vpack.c.bf16 %v1264, %v1261
        %v1285 = vpack.c.bf16 %v1272, %v1269
        %v1286 = vpack.c.bf16 %v1280, %v1277
        %s1287 = scalar_lea.vmem %s5, 4
        %v1288 = vld [vmem:[%s1287] sm:$0xf]
        %s1289 = scalar_lea.vmem %s6, 8
        %v1290 = vld [vmem:[%s1289] sm:$0xf]
        %v1291 = vld [vmem:[%s1289 + $0x4] sm:$0xf]
        %v1294 = vunpack.c.l.b16 %v1290
        %v1295 = vunpack.c.l.b16 %v1291
        %v1296 = vpack.c.b16 %v1295, %v1294
        %1298 = vmatprep.subr.bf16.mxu0 0
        %1299 = vmatpush1.bf16.msra.mxu0 %v1296
        %1300 = vmatprep.subr.bf16.mxu0 0
        %1301 = vmatpush1.bf16.msra.mxu0 0
        %1302 = vmatprep.subr.bf16.mxu0 0
        %1303 = vmatpush1.bf16.msra.mxu0 0
        %1304 = vmatprep.subr.bf16.mxu0 0
        %1305 = vmatpush1.bf16.msra.mxu0 0
        %1306 = vmatprep.subr.bf16.mxu0 0
        %1307 = vmatpush1.bf16.msra.mxu0 0
        %1308 = vmatprep.subr.bf16.mxu0 0
        %1309 = vmatpush1.bf16.msra.mxu0 0
        %1310 = vmatprep.subr.bf16.mxu0 0
        %1311 = vmatpush1.bf16.msra.mxu0 0
        %1312 = vmatprep.subr.bf16.mxu0 0
        %1313 = vmatpush1.bf16.msra.mxu0 0
        %1314 = vmatprep.subr.bf16.mxu0 0
        %1315 = vmatpush1.bf16.msra.mxu0 0
        %1316 = vmatprep.subr.bf16.mxu0 0
        %1317 = vmatpush1.bf16.msra.mxu0 0
        %1318 = vmatprep.subr.bf16.mxu0 0
        %1319 = vmatpush1.bf16.msra.mxu0 0
        %1320 = vmatprep.subr.bf16.mxu0 0
        %1321 = vmatpush1.bf16.msra.mxu0 0
        %1322 = vmatprep.subr.bf16.mxu0 0
        %1323 = vmatpush1.bf16.msra.mxu0 0
        %1324 = vmatprep.subr.bf16.mxu0 0
        %1325 = vmatpush1.bf16.msra.mxu0 0
        %1326 = vmatprep.subr.bf16.mxu0 0
        %1327 = vmatpush1.bf16.msra.mxu0 0
        %1328 = vmatprep.subr.bf16.mxu0 0
        %1329 = vmatpush1.bf16.msra.mxu0 0
        %1330 = vmatprep.mubr.bf16.mxu0 0
        %1331 = vmatmul.mubr.bf16.gmra.mrb[0].mxu0 %v693
        %v1332 = vpop.f32.mrb[0].mxu0
        %v1333 = vadd.f32 0.0, %v1332
        %v1334 = vpop.f32.mrb[0].mxu0
        %v1335 = vpop.f32.mrb[0].mxu0
        %v1336 = vadd.f32 0.0, %v1335
        %v1337 = vpop.f32.mrb[0].mxu0
        %1338 = vmatprep.mubr.bf16.mxu0 0
        %1339 = vmatmul.mubr.bf16.gmra.mrb[0].mxu0 %v696
        %v1340 = vpop.f32.mrb[0].mxu0
        %v1341 = vadd.f32 0.0, %v1340
        %v1342 = vpop.f32.mrb[0].mxu0
        %v1343 = vpop.f32.mrb[0].mxu0
        %v1344 = vadd.f32 0.0, %v1343
        %v1345 = vpop.f32.mrb[0].mxu0
        %1346 = vmatprep.mubr.bf16.mxu0 0
        %1347 = vmatmul.mubr.bf16.gmra.mrb[0].mxu0 %v699
        %v1348 = vpop.f32.mrb[0].mxu0
        %v1349 = vadd.f32 0.0, %v1348
        %v1350 = vpop.f32.mrb[0].mxu0
        %v1351 = vpop.f32.mrb[0].mxu0
        %v1352 = vadd.f32 0.0, %v1351
        %v1353 = vpop.f32.mrb[0].mxu0
        %1354 = vmatprep.mubr.bf16.mxu0 0
        %1355 = vmatmul.mubr.bf16.gmra.mrb[0].mxu0 %v702
        %v1356 = vpop.f32.mrb[0].mxu0
        %v1357 = vadd.f32 0.0, %v1356
        %v1358 = vpop.f32.mrb[0].mxu0
        %v1359 = vpop.f32.mrb[0].mxu0
        %v1360 = vadd.f32 0.0, %v1359
        %v1361 = vpop.f32.mrb[0].mxu0
        %1362 = vdwg.mxu0
        %v1364 = vsel %vm769, %v1283, 0
        %v1367 = vsel %vm769, %v1284, 0
        %v1370 = vsel %vm769, %v1285, 0
        %v1373 = vsel %vm769, %v1286, 0
        %v1376 = vsel %vm782, %v1288, 0
        %1378 = vmatprep.subr.bf16.mxu0 0
        %1379 = vmatpush1.bf16.msra.mxu0 %v1376
        %1380 = vmatprep.subr.bf16.mxu0 0
        %1381 = vmatpush1.bf16.msra.mxu0 0
        %1382 = vmatprep.subr.bf16.mxu0 0
        %1383 = vmatpush1.bf16.msra.mxu0 0
        %1384 = vmatprep.subr.bf16.mxu0 0
        %1385 = vmatpush1.bf16.msra.mxu0 0
        %1386 = vmatprep.subr.bf16.mxu0 0
        %1387 = vmatpush1.bf16.msra.mxu0 0
        %1388 = vmatprep.subr.bf16.mxu0 0
        %1389 = vmatpush1.bf16.msra.mxu0 0
        %1390 = vmatprep.subr.bf16.mxu0 0
        %1391 = vmatpush1.bf16.msra.mxu0 0
        %1392 = vmatprep.subr.bf16.mxu0 0
        %1393 = vmatpush1.bf16.msra.mxu0 0
        %1394 = vmatprep.subr.bf16.mxu0 0
        %1395 = vmatpush1.bf16.msra.mxu0 0
        %1396 = vmatprep.subr.bf16.mxu0 0
        %1397 = vmatpush1.bf16.msra.mxu0 0
        %1398 = vmatprep.subr.bf16.mxu0 0
        %1399 = vmatpush1.bf16.msra.mxu0 0
        %1400 = vmatprep.subr.bf16.mxu0 0
        %1401 = vmatpush1.bf16.msra.mxu0 0
        %1402 = vmatprep.subr.bf16.mxu0 0
        %1403 = vmatpush1.bf16.msra.mxu0 0
        %1404 = vmatprep.subr.bf16.mxu0 0
        %1405 = vmatpush1.bf16.msra.mxu0 0
        %1406 = vmatprep.subr.bf16.mxu0 0
        %1407 = vmatpush1.bf16.msra.mxu0 0
        %1408 = vmatprep.subr.bf16.mxu0 0
        %1409 = vmatpush1.bf16.msra.mxu0 0
        %1410 = vmatprep.mubr.bf16.mxu0 0
        %1411 = vmatmul.mubr.bf16.gmra.mrb[0].mxu0 %v1364
        %v1412 = vpop.f32.mrb[0].mxu0
        %v1413 = vadd.f32 %v1333, %v1412
        %v1414 = vpop.f32.mrb[0].mxu0
        %v1415 = vpop.f32.mrb[0].mxu0
        %v1416 = vadd.f32 %v1336, %v1415
        %v1417 = vpop.f32.mrb[0].mxu0
        %1418 = vmatprep.mubr.bf16.mxu0 0
        %1419 = vmatmul.mubr.bf16.gmra.mrb[0].mxu0 %v1367
        %v1420 = vpop.f32.mrb[0].mxu0
        %v1421 = vadd.f32 %v1341, %v1420
        %v1422 = vpop.f32.mrb[0].mxu0
        %v1423 = vpop.f32.mrb[0].mxu0
        %v1424 = vadd.f32 %v1344, %v1423
        %v1425 = vpop.f32.mrb[0].mxu0
        %1426 = vmatprep.mubr.bf16.mxu0 0
        %1427 = vmatmul.mubr.bf16.gmra.mrb[0].mxu0 %v1370
        %v1428 = vpop.f32.mrb[0].mxu0
        %v1429 = vadd.f32 %v1349, %v1428
        %v1430 = vpop.f32.mrb[0].mxu0
        %v1431 = vpop.f32.mrb[0].mxu0
        %v1432 = vadd.f32 %v1352, %v1431
        %v1433 = vpop.f32.mrb[0].mxu0
        %1434 = vmatprep.mubr.bf16.mxu0 0
        %1435 = vmatmul.mubr.bf16.gmra.mrb[0].mxu0 %v1373
        %v1436 = vpop.f32.mrb[0].mxu0
        %v1437 = vadd.f32 %v1357, %v1436
        %v1438 = vpop.f32.mrb[0].mxu0
        %v1439 = vpop.f32.mrb[0].mxu0
        %v1440 = vadd.f32 %v1360, %v1439
        %v1441 = vpop.f32.mrb[0].mxu0
        %1442 = vdwg.mxu0
        %s1443 = scalar_lea.vmem %s7, 1
        %v1444 = vld [vmem:[%s1443] sm:$0x1]
        %v1446 = vlaneseq
        %v1447 = vshrl.u32 %v1446, 7
        %v1448 = vsub.s32 0, %v1447
        %v1449 = vrot.slane %v1444, %v1448
        %v1451 = vadd.f32 %v1413, %v1449
        %v1452 = vadd.f32 %v1416, %v1449
        %v1453 = vadd.f32 %v1421, %v1449
        %v1454 = vadd.f32 %v1424, %v1449
        %v1455 = vadd.f32 %v1429, %v1449
        %v1456 = vadd.f32 %v1432, %v1449
        %v1457 = vadd.f32 %v1437, %v1449
        %v1458 = vadd.f32 %v1440, %v1449
        %v1459 = vadd.f32 %v1451, 2.0
        %v1460 = vadd.f32 %v1452, 2.0
        %v1461 = vadd.f32 %v1453, 2.0
        %v1462 = vadd.f32 %v1454, 2.0
        %v1463 = vadd.f32 %v1455, 2.0
        %v1464 = vadd.f32 %v1456, 2.0
        %v1465 = vadd.f32 %v1457, 2.0
        %v1466 = vadd.f32 %v1458, 2.0
        %v1467 = vxor.u32 %v1459, 2147483648
        %v1468 = vxor.u32 %v1460, 2147483648
        %v1469 = vxor.u32 %v1461, 2147483648
        %v1470 = vxor.u32 %v1462, 2147483648
        %v1471 = vxor.u32 %v1463, 2147483648
        %v1472 = vxor.u32 %v1464, 2147483648
        %v1473 = vxor.u32 %v1465, 2147483648
        %v1474 = vxor.u32 %v1466, 2147483648
        %v1475 = vmul.f32 %v1467, 1.442695
        %v1476 = vpow.pop %v1475
        %v1477 = vmul.f32 %v1468, 1.442695
        %v1478 = vpow.pop %v1477
        %v1479 = vmul.f32 %v1469, 1.442695
        %v1480 = vpow.pop %v1479
        %v1481 = vmul.f32 %v1470, 1.442695
        %v1482 = vpow.pop %v1481
        %v1483 = vmul.f32 %v1471, 1.442695
        %v1484 = vpow.pop %v1483
        %v1485 = vmul.f32 %v1472, 1.442695
        %v1486 = vpow.pop %v1485
        %v1487 = vmul.f32 %v1473, 1.442695
        %v1488 = vpow.pop %v1487
        %v1489 = vmul.f32 %v1474, 1.442695
        %v1490 = vpow.pop %v1489
        %v1491 = vadd.f32 %v1476, 1.0
        %v1492 = vadd.f32 %v1478, 1.0
        %v1493 = vadd.f32 %v1480, 1.0
        %v1494 = vadd.f32 %v1482, 1.0
        %v1495 = vadd.f32 %v1484, 1.0
        %v1496 = vadd.f32 %v1486, 1.0
        %v1497 = vadd.f32 %v1488, 1.0
        %v1498 = vadd.f32 %v1490, 1.0
        %v1499 = vrcp.pop %v1491
        %v1500 = vmul.f32 1.0, %v1499
        %v1501 = vrcp.pop %v1492
        %v1502 = vmul.f32 1.0, %v1501
        %v1503 = vrcp.pop %v1493
        %v1504 = vmul.f32 1.0, %v1503
        %v1505 = vrcp.pop %v1494
        %v1506 = vmul.f32 1.0, %v1505
        %v1507 = vrcp.pop %v1495
        %v1508 = vmul.f32 1.0, %v1507
        %v1509 = vrcp.pop %v1496
        %v1510 = vmul.f32 1.0, %v1509
        %v1511 = vrcp.pop %v1497
        %v1512 = vmul.f32 1.0, %v1511
        %v1513 = vrcp.pop %v1498
        %v1514 = vmul.f32 1.0, %v1513
        %1523 = vrot.lane.b32.xlu0 %v1451, 8
        %v1524 = vpop.permute.xlu0 %1523
        %1525 = vrot.lane.b32.xlu0 %v1452, 8
        %v1526 = vpop.permute.xlu0 %1525
        %1527 = vrot.lane.b32.xlu0 %v1453, 8
        %v1528 = vpop.permute.xlu0 %1527
        %1529 = vrot.lane.b32.xlu0 %v1454, 8
        %v1530 = vpop.permute.xlu0 %1529
        %1531 = vrot.lane.b32.xlu0 %v1455, 8
        %v1532 = vpop.permute.xlu0 %1531
        %1533 = vrot.lane.b32.xlu0 %v1456, 8
        %v1534 = vpop.permute.xlu0 %1533
        %1535 = vrot.lane.b32.xlu0 %v1457, 8
        %v1536 = vpop.permute.xlu0 %1535
        %1537 = vrot.lane.b32.xlu0 %v1458, 8
        %v1538 = vpop.permute.xlu0 %1537
        %v1547 = vadd.f32 %v1253, %v1524
        %v1548 = vadd.f32 %v1256, %v1526
        %v1549 = vadd.f32 %v1261, %v1528
        %v1550 = vadd.f32 %v1264, %v1530
        %v1551 = vadd.f32 %v1269, %v1532
        %v1552 = vadd.f32 %v1272, %v1534
        %v1553 = vadd.f32 %v1277, %v1536
        %v1554 = vadd.f32 %v1280, %v1538
        %v1555 = vmul.f32 %v1547, %v1500
        %v1556 = vmul.f32 %v1548, %v1502
        %v1557 = vmul.f32 %v1549, %v1504
        %v1558 = vmul.f32 %v1550, %v1506
        %v1559 = vmul.f32 %v1551, %v1508
        %v1560 = vmul.f32 %v1552, %v1510
        %v1561 = vmul.f32 %v1553, %v1512
        %v1562 = vmul.f32 %v1554, %v1514
        %v1563 = vsub.f32 0.0, %v1459
        %v1564 = vsub.f32 0.0, %v1460
        %v1565 = vsub.f32 0.0, %v1461
        %v1566 = vsub.f32 0.0, %v1462
        %v1567 = vsub.f32 0.0, %v1463
        %v1568 = vsub.f32 0.0, %v1464
        %v1569 = vsub.f32 0.0, %v1465
        %v1570 = vsub.f32 0.0, %v1466
        %v1571 = vmax.f32 %v1563, 0.0
        %v1572 = vmax.f32 %v1564, 0.0
        %v1573 = vmax.f32 %v1565, 0.0
        %v1574 = vmax.f32 %v1566, 0.0
        %v1575 = vmax.f32 %v1567, 0.0
        %v1576 = vmax.f32 %v1568, 0.0
        %v1577 = vmax.f32 %v1569, 0.0
        %v1578 = vmax.f32 %v1570, 0.0
        %vm1579 = vcmp.ne.f32.partialorder %v1563, %v1563
        %vm1580 = vcmp.ne.f32.partialorder %v1564, %v1564
        %vm1581 = vcmp.ne.f32.partialorder %v1565, %v1565
        %vm1582 = vcmp.ne.f32.partialorder %v1566, %v1566
        %vm1583 = vcmp.ne.f32.partialorder %v1567, %v1567
        %vm1584 = vcmp.ne.f32.partialorder %v1568, %v1568
        %vm1585 = vcmp.ne.f32.partialorder %v1569, %v1569
        %vm1586 = vcmp.ne.f32.partialorder %v1570, %v1570
        %v1587 = vadd.f32 %v1563, 0.0
        %v1588 = vadd.f32 %v1564, 0.0
        %v1589 = vadd.f32 %v1565, 0.0
        %v1590 = vadd.f32 %v1566, 0.0
        %v1591 = vadd.f32 %v1567, 0.0
        %v1592 = vadd.f32 %v1568, 0.0
        %v1593 = vadd.f32 %v1569, 0.0
        %v1594 = vadd.f32 %v1570, 0.0
        %v1595 = vand.u32 2147483647, %v1563
        %v1596 = vand.u32 2147483647, %v1564
        %v1597 = vand.u32 2147483647, %v1565
        %v1598 = vand.u32 2147483647, %v1566
        %v1599 = vand.u32 2147483647, %v1567
        %v1600 = vand.u32 2147483647, %v1568
        %v1601 = vand.u32 2147483647, %v1569
        %v1602 = vand.u32 2147483647, %v1570
        %v1603 = vsub.f32 0.0, %v1595
        %v1604 = vsub.f32 0.0, %v1596
        %v1605 = vsub.f32 0.0, %v1597
        %v1606 = vsub.f32 0.0, %v1598
        %v1607 = vsub.f32 0.0, %v1599
        %v1608 = vsub.f32 0.0, %v1600
        %v1609 = vsub.f32 0.0, %v1601
        %v1610 = vsub.f32 0.0, %v1602
        %v1611 = vmul.f32 %v1603, 1.442695
        %v1612 = vpow.pop %v1611
        %v1613 = vmul.f32 %v1604, 1.442695
        %v1614 = vpow.pop %v1613
        %v1615 = vmul.f32 %v1605, 1.442695
        %v1616 = vpow.pop %v1615
        %v1617 = vmul.f32 %v1606, 1.442695
        %v1618 = vpow.pop %v1617
        %v1619 = vmul.f32 %v1607, 1.442695
        %v1620 = vpow.pop %v1619
        %v1621 = vmul.f32 %v1608, 1.442695
        %v1622 = vpow.pop %v1621
        %v1623 = vmul.f32 %v1609, 1.442695
        %v1624 = vpow.pop %v1623
        %v1625 = vmul.f32 %v1610, 1.442695
        %v1626 = vpow.pop %v1625
        %v1627 = vadd.f32 %v1612, 1.0
        %v1628 = vlog2.pop %v1627
        %v1629 = vmul.f32 %v1628, 0.6931472
        %v1630 = vmul.f32 -0.5, %v1612
        %v1631 = vadd.f32 %v1630, 1.0
        %v1632 = vmul.f32 %v1631, %v1612
        %v1633 = vand.u32 2147483647, %v1612
        %vm1634 = vcmp.lt.f32.partialorder %v1633, 0.0004427343
        %v1635 = vsel %vm1634, %v1632, %v1629
        %v1636 = vadd.f32 %v1614, 1.0
        %v1637 = vlog2.pop %v1636
        %v1638 = vmul.f32 %v1637, 0.6931472
        %v1639 = vmul.f32 -0.5, %v1614
        %v1640 = vadd.f32 %v1639, 1.0
        %v1641 = vmul.f32 %v1640, %v1614
        %v1642 = vand.u32 2147483647, %v1614
        %vm1643 = vcmp.lt.f32.partialorder %v1642, 0.0004427343
        %v1644 = vsel %vm1643, %v1641, %v1638
        %v1645 = vadd.f32 %v1616, 1.0
        %v1646 = vlog2.pop %v1645
        %v1647 = vmul.f32 %v1646, 0.6931472
        %v1648 = vmul.f32 -0.5, %v1616
        %v1649 = vadd.f32 %v1648, 1.0
        %v1650 = vmul.f32 %v1649, %v1616
        %v1651 = vand.u32 2147483647, %v1616
        %vm1652 = vcmp.lt.f32.partialorder %v1651, 0.0004427343
        %v1653 = vsel %vm1652, %v1650, %v1647
        %v1654 = vadd.f32 %v1618, 1.0
        %v1655 = vlog2.pop %v1654
        %v1656 = vmul.f32 %v1655, 0.6931472
        %v1657 = vmul.f32 -0.5, %v1618
        %v1658 = vadd.f32 %v1657, 1.0
        %v1659 = vmul.f32 %v1658, %v1618
        %v1660 = vand.u32 2147483647, %v1618
        %vm1661 = vcmp.lt.f32.partialorder %v1660, 0.0004427343
        %v1662 = vsel %vm1661, %v1659, %v1656
        %v1663 = vadd.f32 %v1620, 1.0
        %v1664 = vlog2.pop %v1663
        %v1665 = vmul.f32 %v1664, 0.6931472
        %v1666 = vmul.f32 -0.5, %v1620
        %v1667 = vadd.f32 %v1666, 1.0
        %v1668 = vmul.f32 %v1667, %v1620
        %v1669 = vand.u32 2147483647, %v1620
        %vm1670 = vcmp.lt.f32.partialorder %v1669, 0.0004427343
        %v1671 = vsel %vm1670, %v1668, %v1665
        %v1672 = vadd.f32 %v1622, 1.0
        %v1673 = vlog2.pop %v1672
        %v1674 = vmul.f32 %v1673, 0.6931472
        %v1675 = vmul.f32 -0.5, %v1622
        %v1676 = vadd.f32 %v1675, 1.0
        %v1677 = vmul.f32 %v1676, %v1622
        %v1678 = vand.u32 2147483647, %v1622
        %vm1679 = vcmp.lt.f32.partialorder %v1678, 0.0004427343
        %v1680 = vsel %vm1679, %v1677, %v1674
        %v1681 = vadd.f32 %v1624, 1.0
        %v1682 = vlog2.pop %v1681
        %v1683 = vmul.f32 %v1682, 0.6931472
        %v1684 = vmul.f32 -0.5, %v1624
        %v1685 = vadd.f32 %v1684, 1.0
        %v1686 = vmul.f32 %v1685, %v1624
        %v1687 = vand.u32 2147483647, %v1624
        %vm1688 = vcmp.lt.f32.partialorder %v1687, 0.0004427343
        %v1689 = vsel %vm1688, %v1686, %v1683
        %v1690 = vadd.f32 %v1626, 1.0
        %v1691 = vlog2.pop %v1690
        %v1692 = vmul.f32 %v1691, 0.6931472
        %v1693 = vmul.f32 -0.5, %v1626
        %v1694 = vadd.f32 %v1693, 1.0
        %v1695 = vmul.f32 %v1694, %v1626
        %v1696 = vand.u32 2147483647, %v1626
        %vm1697 = vcmp.lt.f32.partialorder %v1696, 0.0004427343
        %v1698 = vsel %vm1697, %v1695, %v1692
        %v1699 = vadd.f32 %v1571, %v1635
        %v1700 = vadd.f32 %v1572, %v1644
        %v1701 = vadd.f32 %v1573, %v1653
        %v1702 = vadd.f32 %v1574, %v1662
        %v1703 = vadd.f32 %v1575, %v1671
        %v1704 = vadd.f32 %v1576, %v1680
        %v1705 = vadd.f32 %v1577, %v1689
        %v1706 = vadd.f32 %v1578, %v1698
        %v1707 = vsel %vm1579, %v1587, %v1699
        %v1708 = vsel %vm1580, %v1588, %v1700
        %v1709 = vsel %vm1581, %v1589, %v1701
        %v1710 = vsel %vm1582, %v1590, %v1702
        %v1711 = vsel %vm1583, %v1591, %v1703
        %v1712 = vsel %vm1584, %v1592, %v1704
        %v1713 = vsel %vm1585, %v1593, %v1705
        %v1714 = vsel %vm1586, %v1594, %v1706
        %v1715 = vsub.f32 0.0, %v1707
        %v1716 = vsub.f32 0.0, %v1708
        %v1717 = vsub.f32 0.0, %v1709
        %v1718 = vsub.f32 0.0, %v1710
        %v1719 = vsub.f32 0.0, %v1711
        %v1720 = vsub.f32 0.0, %v1712
        %v1721 = vsub.f32 0.0, %v1713
        %v1722 = vsub.f32 0.0, %v1714
        %v1723 = vsel %vm1130, %v1715, 0.0
        %v1724 = vsel %vm1130, %v1716, 0.0
        %v1725 = vadd.f32 %v1723, %v1724
        %v1726 = vsel %vm1130, %v1717, 0.0
        %v1727 = vadd.f32 %v1725, %v1726
        %v1728 = vsel %vm1130, %v1718, 0.0
        %v1729 = vadd.f32 %v1727, %v1728
        %v1730 = vsel %vm1130, %v1719, 0.0
        %v1731 = vadd.f32 %v1729, %v1730
        %v1732 = vsel %vm1130, %v1720, 0.0
        %v1733 = vadd.f32 %v1731, %v1732
        %v1734 = vsel %vm1130, %v1721, 0.0
        %v1735 = vadd.f32 %v1733, %v1734
        %v1736 = vsel %vm1130, %v1722, 0.0
        %v1737 = vadd.f32 %v1735, %v1736
        %v1738 = vrot.slane %v1737, 4
        %v1739 = vadd.f32 %v1737, %v1738
        %v1740 = vrot.slane %v1739, 2
        %v1741 = vadd.f32 %v1739, %v1740
        %v1742 = vrot.slane %v1741, 1
        %v1743 = vadd.f32 %v1741, %v1742
        %v1744 = vadd.f32 %v1152, %v1743
        %v1745 = vsel %vm769, %v1253, %v1555
        %v1746 = vsel %vm769, %v1256, %v1556
        %v1747 = vsel %vm769, %v1261, %v1557
        %v1748 = vsel %vm769, %v1264, %v1558
        %v1749 = vsel %vm769, %v1269, %v1559
        %v1750 = vsel %vm769, %v1272, %v1560
        %v1751 = vsel %vm769, %v1277, %v1561
        %v1752 = vsel %vm769, %v1280, %v1562
        %1753 = vst.msk [vmem:[%s416] sm:$0xff] %vm495, %v1745
        %1754 = vst.msk [vmem:[%s416 + $0x8] sm:$0xff] %vm495, %v1746
        %1755 = vst.msk [vmem:[%s416 + $0x10] sm:$0xff] %vm495, %v1747
        %1756 = vst.msk [vmem:[%s416 + $0x18] sm:$0xff] %vm495, %v1748
        %1757 = vst.msk [vmem:[%s416 + $0x20] sm:$0xff] %vm495, %v1749
        %1758 = vst.msk [vmem:[%s416 + $0x28] sm:$0xff] %vm495, %v1750
        %1759 = vst.msk [vmem:[%s416 + $0x30] sm:$0xff] %vm495, %v1751
        %1760 = vst.msk [vmem:[%s416 + $0x38] sm:$0xff] %vm495, %v1752
        %v1761 = vld [vmem:[%s387] sm:$0x1]
        %v1764 = vunpack.c.l.s4 1966171168
        %v1765 = vunpack.c.0.s8 %v1764
        %v1766 = vlaneseq
        %v1767 = vshrl.u32 %v1766, 7
        %v1768 = vsub.s32 %v1765, %v1767
        %v1769 = vrot.slane %v1744, %v1768
        %v1771 = vunpack.c.l.s4 1966171168
        %v1772 = vunpack.c.0.s8 %v1771
        %v1773 = vlaneseq
        %v1774 = vshrl.u32 %v1773, 7
        %v1775 = vsub.s32 %v1772, %v1774
        %v1776 = vrot.slane %v1769, %v1775
        %1777 = vrot.lane.b32.xlu0 %v1776, 120
        %v1778 = vpop.permute.xlu0 %1777
        %v1780 = vadd.f32 %v1761, %v1778
        %vm1781 = vcmask 57344
        %1782 = vst.msk [vmem:[%s387] sm:$0x1] %vm1781, %v1780
        %s1783 = smul.u32 8, %s29
        %p1784 = scmp.lt.s32.totalorder %s28, 1
        %s1785 = scalar_select %p1784, %s28, 1
        %p1786 = scmp.lt.s32.totalorder %s1783, 7
        %s1787 = scalar_select %p1786, %s1783, 7
        %s1788 = smul.addr %s1785, 8
        %s1789 = sadd.s32 %s1787, %s1788
        %s1790 = smul.addr %s1789, 8
        %s1791 = scalar_lea.vmem %s8, %s1790
        %s1792 = sand.u32 %s254, 1
        %s1793 = scalar_lea.sflag [#allocation3], %s1792
        %s1794 = sand.u32 %s254, 1
        %s1795 = scalar_lea.vmem [#allocation2], %s1794
        // Predicated region
        $region57: #{tpu_custom_call.1} parent=51 // pred_check
          %p1796 = pneg %p238
        $region58: #{tpu_custom_call.1} parent=51 // pred_check_branch
          %1798 = sbr.rel (%p1796) target = $region60
        $region59: #{tpu_custom_call.1} parent=51 // pred_region
          %s1799 = smul.u32 8, %s29
        $region60: #{tpu_custom_call.1} parent=51 // pred_fallthru
          _
        // Predicated region
        $region61: #{tpu_custom_call.1} parent=51 // pred_check
          %p1800 = pneg %p264
        $region62: #{tpu_custom_call.1} parent=51 // pred_check_branch
          %1802 = sbr.rel (%p1800) target = $region64
        $region63: #{tpu_custom_call.1} parent=51 // pred_region
          %s1804 = ssub.s32 16, 16
          %1805 = vsyncadd %s1793, %s1804
          %s1806 = smul.addr %s28, 16
          %s1807 = scalar_lea.hbm %s9, %s1806
          %s1809 = sshll.u32 %s1795, 4
          %s1810 = int_to_ptr.vmem [resolvable:$true] %s1809
          %1812 = dma.vmem_to_hbm [thread:$0]  %s1810, 16, %s1807, %s1793
        $region64: #{tpu_custom_call.1} parent=51 // pred_fallthru
          _
      $region52: #{tpu_custom_call.1} parent=5 // pred_fallthru
        _
      %p1813 = scmp.le.s32.totalorder 2, %s19
      // Predicated region
      $region65: #{tpu_custom_call.1} parent=5 // pred_check
        %p1814 = pneg %p1813
      $region66: #{tpu_custom_call.1} parent=5 // pred_check_branch
        %1816 = sbr.rel (%p1814) target = $region68
      $region67: #{tpu_custom_call.1} parent=5 // pred_region
        %s1817 = ssub.s32 %s19, 2
        // Predicated region
        $region69: #{tpu_custom_call.1} parent=67 // pred_check
          %p1818 = pneg %p244
        $region70: #{tpu_custom_call.1} parent=67 // pred_check_branch
          %1820 = sbr.rel (%p1818) target = $region72
        $region71: #{tpu_custom_call.1} parent=67 // pred_region
          %s1821 = smul.u32 8, %s31
          %p1822 = scmp.lt.s32.totalorder %s30, 1
          %s1823 = scalar_select %p1822, %s30, 1
          %p1824 = scmp.lt.s32.totalorder %s1821, 7
          %s1825 = scalar_select %p1824, %s1821, 7
          %s1826 = smul.addr %s1823, 8
          %s1827 = sadd.s32 %s1825, %s1826
          %s1828 = smul.addr %s1827, 8
          %s1829 = scalar_lea.vmem %s8, %s1828
        $region72: #{tpu_custom_call.1} parent=67 // pred_fallthru
          _
        // Predicated region
        $region73: #{tpu_custom_call.1} parent=67 // pred_check
          %p1830 = pneg %p270
        $region74: #{tpu_custom_call.1} parent=67 // pred_check_branch
          %1832 = sbr.rel (%p1830) target = $region76
        $region75: #{tpu_custom_call.1} parent=67 // pred_region
          %s1833 = sand.u32 %s255, 1
          %s1834 = scalar_lea.sflag [#allocation3], %s1833
          %s1835 = sand.u32 %s255, 1
          %s1836 = scalar_lea.vmem [#allocation2], %s1835
          %1837 = dma.done %s1834, 16
        $region76: #{tpu_custom_call.1} parent=67 // pred_fallthru
          _
      $region68: #{tpu_custom_call.1} parent=5 // pred_fallthru
        _
    $region6: #{tpu_custom_call.1} parent=1 // loop_footer
      %s23 = sadd.s32 1, %s19
    $region7: #{tpu_custom_call.1} parent=1 // loop_footer_branch
      %18 = sbr.rel target = $region3
    $region8: #{tpu_custom_call.1} parent=1 // loop_exit
      _
    %1838 = vsyncpa [#allocation3], 1
    %s1839 = scalar_lea.sflag [#allocation3], 1
    %1840 = vsyncpa %s1839, 1

</llo_original>
